<compile_context>
chip_gen: v5e
topology: v5e:2x2
jax: 0.10.0
libtpu: 0.0.40
codegen_flags: <defaults>
</compile_context>

<pallas_src>
import functools

import numpy as np
import jax
import jax.numpy as jnp
from jax import lax
from jax.experimental import pallas as pl
from jax.experimental.pallas import tpu as pltpu


def _round_up(a, m):
    return (a + m - 1) // m * m


# ----------------------------------------------------------------------------
# DownsampleBlock kernel
# ----------------------------------------------------------------------------
def _downsample_kernel(x_ref, w1_ref, b1_ref, w2_ref, b2_ref, mask_ref, sel_ref,
                       *out_refs, H, W, pk, ps, emit_conv):
    # x_ref:    (1, Cin_p, (H+2)*(W+2))   zero-padded input, channel-major flat
    # w1_ref:   (Cmid_p, 9*Cin_p)   bf16   im2col conv1 weights (tap-major)
    # b1_ref:   (Cmid_p, 1)         f32
    # w2_ref:   (3, Cout_p, 3*Cmid_p) bf16 conv2 weights, one mat per tap row ky
    # b2_ref:   (Cout_p, 1)         f32
    # mask_ref: (1, L)              f32    1.0 on valid cols, 0.0 on wrap cols
    # sel_ref:  (Lp, HoWo_pad)      bf16   0/1 pooling-stride selection matrix
    # out_refs: ([conv_ref (1, Cout_p, Lconv_pad)], pool_ref (1, Cout_p, HoWo_pad))
    if emit_conv:
        conv_ref, pool_ref = out_refs
    else:
        (pool_ref,) = out_refs

    Wp = W + 2
    L = H * Wp - 2
    Lp = sel_ref.shape[0]
    Cmid_p = w1_ref.shape[0]
    Cout_p = w2_ref.shape[1]

    taps = [ky * Wp + kx for ky in range(3) for kx in range(3)]

    # ---- conv1: ONE im2col matmul (bf16 operands, f32 accumulation) ----
    xb = x_ref[0].astype(jnp.bfloat16)                         # (Cin_p, Ppad)
    patches1 = jnp.concatenate([xb[:, t:t + L] for t in taps], axis=0)
    acc1 = jnp.dot(w1_ref[...], patches1, preferred_element_type=jnp.float32)
    # bias + ReLU + junk-column zeroing in f32, single cast to bf16 afterwards.
    h = jnp.maximum(acc1 + b1_ref[...], 0.0) * mask_ref[...]   # (Cmid_p, L) f32
    h_bf = h.astype(jnp.bfloat16)

    # Re-embed conv1 activations into a zero-bordered flat frame (value op only).
    zpad = jnp.zeros((Cmid_p, Wp + 1), jnp.bfloat16)
    h_pad = jnp.concatenate([zpad, h_bf, zpad], axis=1)        # (Cmid_p, (H+2)*Wp)

    # ---- conv2: 3 accumulated matmuls (one per tap row, K = 3*Cmid_p) ----
    acc2 = None
    for ky in range(3):
        rhs = jnp.concatenate(
            [h_pad[:, ky * Wp + kx: ky * Wp + kx + L] for kx in range(3)], axis=0)
        part = jnp.dot(w2_ref[ky], rhs, preferred_element_type=jnp.float32)
        acc2 = part if acc2 is None else acc2 + part
    conv = jnp.maximum(acc2 + b2_ref[...], 0.0)                # (Cout_p, L) f32

    if emit_conv:
        # Lane-dense store: pad flat length L -> Lconv_pad (multiple of 128).
        pad_cols = conv_ref.shape[-1] - L
        conv_ref[0] = jnp.concatenate(
            [conv, jnp.zeros((Cout_p, pad_cols), conv.dtype)], axis=1
        ).astype(conv_ref.dtype)

    # ---- max-pool straight from the in-register conv value ----
    # elementwise max over pk*pk window taps (contiguous lane shifts, f32), then
    # one 0/1 selection matmul realizes the spatial stride; its output is
    # already lane-dense (HoWo_pad columns).
    m = None
    for ki in range(pk):
        for kj in range(pk):
            t = ki * Wp + kj
            tap = conv[:, t:t + Lp]
            m = tap if m is None else jnp.maximum(m, tap)
    pooled = jnp.dot(m.astype(jnp.bfloat16), sel_ref[...],
                     preferred_element_type=jnp.float32)
    pool_ref[0] = pooled.astype(pool_ref.dtype)


def downsample_block(x, w1, b1, w2, b2, pool_kernel, pool_stride, *,
                     return_conv=True):
    """Conv3x3(pad1)->ReLU->Conv3x3(pad1)->ReLU (+MaxPool).  NCHW in/out.

    x: (N, Cin, H, W); w1: (Cmid, Cin, 3, 3); w2: (Cout, Cmid, 3, 3).
    Returns (conv_out, pool_out) if return_conv else pool_out.
    """
    N, Cin, H, W = x.shape
    Cmid = w1.shape[0]
    Cout = w2.shape[0]
    pk, ps = pool_kernel, pool_stride
    Ho = (H - pk) // ps + 1
    Wo = (W - pk) // ps + 1
    Wp = W + 2
    Ppad = (H + 2) * Wp
    L = H * Wp - 2                                   # flat conv window length
    Lp = (Ho - 1) * ps * Wp + (Wo - 1) * ps + 1      # flat pooling window length

    # Sublane-aligned channel padding (zeros; free w.r.t. hardware layout).
    Cin_p = _round_up(Cin, 8)
    Cmid_p = _round_up(Cmid, 8)
    Cout_p = _round_up(Cout, 8)
    HoWo = Ho * Wo
    HoWo_p = _round_up(HoWo, 128)                    # lane-dense pooled store
    Lconv_p = _round_up(H * Wp, 128)                 # lane-dense conv store

    # Channel pad + spatial zero border + flatten (channel-major, no transposes).
    # TODO(synk): the spatial border pad stays a (cheap) wrapper-side XLA pad;
    # doing it in-kernel needs a per-row column insert that Mosaic reshapes
    # don't express cleanly.
    x_flat = jnp.pad(x, ((0, 0), (0, Cin_p - Cin), (1, 1), (1, 1))
                     ).reshape(N, Cin_p, Ppad)

    # im2col conv1 weights: (O,I,3,3) -> (O,ky,kx,I) -> (O, 9*I), bf16.
    w1p = jnp.pad(w1, ((0, Cmid_p - Cmid), (0, Cin_p - Cin), (0, 0), (0, 0)))
    w1_mat = jnp.transpose(w1p, (0, 2, 3, 1)).reshape(Cmid_p, 9 * Cin_p
                                                      ).astype(jnp.bfloat16)
    b1_col = jnp.pad(b1, (0, Cmid_p - Cmid)).reshape(Cmid_p, 1)

    # conv2 weights as 3 per-tap-row matrices: (ky, O, kx*I), bf16.
    w2p = jnp.pad(w2, ((0, Cout_p - Cout), (0, Cmid_p - Cmid), (0, 0), (0, 0)))
    w2_rows = jnp.transpose(w2p, (2, 0, 3, 1)).reshape(3, Cout_p, 3 * Cmid_p
                                                       ).astype(jnp.bfloat16)
    b2_col = jnp.pad(b2, (0, Cout_p - Cout)).reshape(Cout_p, 1)

    # Valid-column mask for the flat conv1 activation (zeros the 2 wrap cols/row).
    cols = np.arange(L) % Wp
    mask = jnp.asarray((cols < W).astype(np.float32).reshape(1, L))

    # 0/1 selection matrix realizing the pooling stride as a matmul; its column
    # count is padded to a multiple of 128 so the pooled store is lane-dense.
    sel_np = np.zeros((Lp, HoWo_p), np.float32)
    for i in range(Ho):
        for j in range(Wo):
            sel_np[i * ps * Wp + j * ps, i * Wo + j] = 1.0
    sel = jnp.asarray(sel_np, dtype=jnp.bfloat16)

    kernel = functools.partial(_downsample_kernel, H=H, W=W, pk=pk, ps=ps,
                               emit_conv=return_conv)

    pool_shape = jax.ShapeDtypeStruct((N, Cout_p, HoWo_p), x.dtype)
    pool_spec = pl.BlockSpec((1, Cout_p, HoWo_p), lambda n: (n, 0, 0))
    if return_conv:
        out_shape = (jax.ShapeDtypeStruct((N, Cout_p, Lconv_p), x.dtype),
                     pool_shape)
        out_specs = (pl.BlockSpec((1, Cout_p, Lconv_p), lambda n: (n, 0, 0)),
                     pool_spec)
    else:
        out_shape = pool_shape
        out_specs = pool_spec

    result = pl.pallas_call(
        kernel,
        out_shape=out_shape,
        grid_spec=pltpu.PrefetchScalarGridSpec(
            num_scalar_prefetch=0,
            grid=(N,),
            in_specs=[
                pl.BlockSpec((1, Cin_p, Ppad), lambda n: (n, 0, 0)),
                pl.BlockSpec((Cmid_p, 9 * Cin_p), lambda n: (0, 0)),
                pl.BlockSpec((Cmid_p, 1), lambda n: (0, 0)),
                pl.BlockSpec((3, Cout_p, 3 * Cmid_p), lambda n: (0, 0, 0)),
                pl.BlockSpec((Cout_p, 1), lambda n: (0, 0)),
                pl.BlockSpec((1, L), lambda n: (0, 0)),
                pl.BlockSpec((Lp, HoWo_p), lambda n: (0, 0)),
            ],
            out_specs=out_specs,
        ),
        compiler_params=pltpu.CompilerParams(
            dimension_semantics=("parallel",),       # batch -> both TCs on v7x
            vmem_limit_bytes=32 * 1024 * 1024),
    )(x_flat, w1_mat, b1_col, w2_rows, b2_col, mask, sel)

    if return_conv:
        conv_flat, pool_flat = result
        conv_out = (conv_flat[:, :Cout, :H * Wp]
                    .reshape(N, Cout, H, Wp)[:, :, :, :W])
    else:
        pool_flat = result
    pool_out = pool_flat[:, :Cout, :HoWo].reshape(N, Cout, Ho, Wo)
    return (conv_out, pool_out) if return_conv else pool_out


# ----------------------------------------------------------------------------
# Projection kernel (Linear + ReLU), lane-dense padded output, bf16 MXU operands
# ----------------------------------------------------------------------------
def _projection_kernel(x_ref, w_ref, b_ref, o_ref):
    y = jnp.dot(x_ref[...].astype(jnp.bfloat16), w_ref[...],
                preferred_element_type=jnp.float32)
    o_ref[...] = jnp.maximum(y + b_ref[...], 0.0).astype(o_ref.dtype)


def projection(x2d, weight, bias):
    """PyTorch nn.Linear(in,out) + ReLU.  weight: (out, in), bias: (out,)."""
    # TODO(synk): for very large Din this should be K-tiled (grid over Din with a
    # VMEM f32 accumulator) or fused into the downsample epilogue; not needed at
    # these sizes.
    N, Din = x2d.shape
    Dout = weight.shape[0]
    Dout_p = _round_up(Dout, 128)
    w_t = jnp.pad(weight, ((0, Dout_p - Dout), (0, 0))).T.astype(jnp.bfloat16)
    b_row = jnp.pad(bias, (0, Dout_p - Dout)).reshape(1, Dout_p)
    out = pl.pallas_call(
        _projection_kernel,
        out_shape=jax.ShapeDtypeStruct((N, Dout_p), x2d.dtype),
        grid_spec=pltpu.PrefetchScalarGridSpec(
            num_scalar_prefetch=0,
            grid=(1,),
            in_specs=[
                pl.BlockSpec((N, Din), lambda i: (0, 0)),
                pl.BlockSpec((Din, Dout_p), lambda i: (0, 0)),
                pl.BlockSpec((1, Dout_p), lambda i: (0, 0)),
            ],
            out_specs=pl.BlockSpec((N, Dout_p), lambda i: (0, 0)),
        ),
        compiler_params=pltpu.CompilerParams(
            dimension_semantics=("arbitrary",),
            vmem_limit_bytes=32 * 1024 * 1024),
    )(x2d, w_t, b_row)
    return out[:, :Dout]


# ----------------------------------------------------------------------------
# MedVisExtractor forward
# ----------------------------------------------------------------------------
def med_vis_extractor_forward(x, down_params, proj_params, clip_visual_encoder):
    skip = []
    for (w1, b1, w2, b2, pk, ps) in down_params:
        # The extractor never consumes conv_out -> skip its HBM writeback.
        pool_out = downsample_block(x, w1, b1, w2, b2, pk, ps, return_conv=False)
        x = pool_out
        skip.append(pool_out.reshape(pool_out.shape[0], -1))
    skip_connections = [projection(s, w, b)
                        for (w, b), s in zip(proj_params, skip)]
    down_features = x.astype(jnp.float16)            # matches .half()
    clip_output = clip_visual_encoder(down_features)
    result = clip_output
    for sc in skip_connections:                      # tiny (N, clip_dim) glue
        result = 0.3 * sc + 0.7 * result
    return result


# ----------------------------------------------------------------------------
# Pure-JAX reference (for verification)
# ----------------------------------------------------------------------------
def _reference_down(x, w1, b1, w2, b2, pk, ps):
    dn = lax.conv_dimension_numbers(x.shape, w1.shape, ("NCHW", "OIHW", "NCHW"))
    h = lax.conv_general_dilated(x, w1, (1, 1), ((1, 1), (1, 1)),
                                 dimension_numbers=dn)
    h = jnp.maximum(h + b1[None, :, None, None], 0.0)
    c = lax.conv_general_dilated(h, w2, (1, 1), ((1, 1), (1, 1)),
                                 dimension_numbers=dn)
    c = jnp.maximum(c + b2[None, :, None, None], 0.0)
    p = lax.reduce_window(c, -jnp.inf, lax.max,
                          (1, 1, pk, pk), (1, 1, ps, ps), "VALID")
    return c, p


if __name__ == "__main__":
    key = jax.random.PRNGKey(0)
    keys = jax.random.split(key, 8)

    # Shapes consistent with MedVisExtractor(in_channels=4, clip_dim=32,
    # input_dim=16, hidden_dim=32): features=[32] -> one DownsampleBlock(4,32,2,2)
    # and one Projection(32, 8, 32).
    N, Cin, H = 2, 4, 16
    hidden = 32
    clip_dim = 32
    Cmid = hidden + 9                    # out_channels + 9
    pk, ps = 2, 2

    x = jax.random.normal(keys[0], (N, Cin, H, H), jnp.float32)
    w1 = jax.random.normal(keys[1], (Cmid, Cin, 3, 3), jnp.float32) * 0.1
    b1 = jax.random.normal(keys[2], (Cmid,), jnp.float32) * 0.1
    w2 = jax.random.normal(keys[3], (hidden, Cmid, 3, 3), jnp.float32) * 0.1
    b2 = jax.random.normal(keys[4], (hidden,), jnp.float32) * 0.1

    Ho = (H - pk) // ps + 1
    proj_in = hidden * Ho * Ho
    pw = jax.random.normal(keys[5], (clip_dim, proj_in), jnp.float32) * 0.02
    pb = jax.random.normal(keys[6], (clip_dim,), jnp.float32) * 0.02

    # TODO(synk): clip_visual_encoder is an external, user-supplied module (e.g.
    # a CLIP ViT); it has no Pallas translation here and is stubbed with a
    # plain-JAX linear over the flattened half-precision features.
    cw = jax.random.normal(keys[7], (proj_in, clip_dim), jnp.float32) * 0.02

    def clip_visual_encoder(feat_half):
        flat = feat_half.reshape(feat_half.shape[0], -1).astype(jnp.float32)
        return flat @ cw

    down_params = [(w1, b1, w2, b2, pk, ps)]
    proj_params = [(pw, pb)]

    # --- Pallas forward (inference path, conv writeback dropped) ---
    out = med_vis_extractor_forward(x, down_params, proj_params,
                                    clip_visual_encoder)
    # --- DownsampleBlock API parity path (conv_out + pool_out) ---
    conv_out, pool_out = downsample_block(x, w1, b1, w2, b2, pk, ps,
                                          return_conv=True)
    jax.block_until_ready((out, conv_out, pool_out))

    # --- reference ---
    ref_conv, ref_pool = _reference_down(x, w1, b1, w2, b2, pk, ps)
    ref_skip = ref_pool.reshape(N, -1)
    ref_proj = jnp.maximum(ref_skip @ pw.T + pb, 0.0)
    ref_clip = clip_visual_encoder(ref_pool.astype(jnp.float16))
    ref_out = 0.3 * ref_proj + 0.7 * ref_clip

    assert conv_out.shape == (N, hidden, H, H)
    assert pool_out.shape == (N, hidden, Ho, Ho)
    assert out.shape == (N, clip_dim)
    # Tolerances loosened vs. the f32-MXU version: matmuls now use bf16 operands
    # (f32 accumulation), per the performance review.
    assert jnp.allclose(conv_out, ref_conv, atol=5e-2, rtol=5e-2)
    assert jnp.allclose(pool_out, ref_pool, atol=5e-2, rtol=5e-2)
    assert jnp.allclose(out, ref_out, atol=5e-2, rtol=5e-2)
    print("KERNEL_OK")
</pallas_src>

<mosaic_0001>
module attributes {stable_mosaic.version = 11 : i64} {
  func.func @_downsample_kernel(%arg0: i32, %arg1: memref<1x8x324xf32, #tpu.memory_space<vmem>>, %arg2: memref<48x72xbf16, #tpu.memory_space<vmem>>, %arg3: memref<48x1xf32, #tpu.memory_space<vmem>>, %arg4: memref<3x32x144xbf16, #tpu.memory_space<vmem>>, %arg5: memref<32x1xf32, #tpu.memory_space<vmem>>, %arg6: memref<1x286xf32, #tpu.memory_space<vmem>>, %arg7: memref<267x128xbf16, #tpu.memory_space<vmem>>, %arg8: memref<1x32x128xf32, #tpu.memory_space<vmem>>) attributes {dimension_semantics = [#tpu.dimension_semantics<parallel>], iteration_bounds = array<i64: 2>, scalar_prefetch = 0 : i64, scratch_operands = 0 : i64, tpu.core_type = #tpu.core_type<tc>, window_params = [{transform_indices = @transform_0, window_bounds = array<i64: 1, 8, 324>}, {pipeline_mode = #tpu.pipeline_mode<synchronous>, transform_indices = @transform_1, window_bounds = array<i64: 48, 72>}, {pipeline_mode = #tpu.pipeline_mode<synchronous>, transform_indices = @transform_2, window_bounds = array<i64: 48, 1>}, {pipeline_mode = #tpu.pipeline_mode<synchronous>, transform_indices = @transform_3, window_bounds = array<i64: 3, 32, 144>}, {pipeline_mode = #tpu.pipeline_mode<synchronous>, transform_indices = @transform_4, window_bounds = array<i64: 32, 1>}, {pipeline_mode = #tpu.pipeline_mode<synchronous>, transform_indices = @transform_5, window_bounds = array<i64: 1, 286>}, {pipeline_mode = #tpu.pipeline_mode<synchronous>, transform_indices = @transform_6, window_bounds = array<i64: 267, 128>}, {transform_indices = @transform_7, window_bounds = array<i64: 1, 32, 128>}]} {
    %c0 = arith.constant 0 : index
    %c0_0 = arith.constant 0 : index
    %c0_1 = arith.constant 0 : index
    %0 = vector.load %arg1[%c0, %c0_0, %c0_1] : memref<1x8x324xf32, #tpu.memory_space<vmem>>, vector<1x8x324xf32>
    %1 = vector.shape_cast %0 : vector<1x8x324xf32> to vector<8x324xf32>
    %2 = arith.truncf %1 : vector<8x324xf32> to vector<8x324xbf16>
    %3 = vector.extract_strided_slice %2 {offsets = [0, 0], sizes = [8, 286], strides = [1, 1]} : vector<8x324xbf16> to vector<8x286xbf16>
    %4 = vector.extract_strided_slice %2 {offsets = [0, 1], sizes = [8, 286], strides = [1, 1]} : vector<8x324xbf16> to vector<8x286xbf16>
    %5 = vector.extract_strided_slice %2 {offsets = [0, 2], sizes = [8, 286], strides = [1, 1]} : vector<8x324xbf16> to vector<8x286xbf16>
    %6 = vector.extract_strided_slice %2 {offsets = [0, 18], sizes = [8, 286], strides = [1, 1]} : vector<8x324xbf16> to vector<8x286xbf16>
    %7 = vector.extract_strided_slice %2 {offsets = [0, 19], sizes = [8, 286], strides = [1, 1]} : vector<8x324xbf16> to vector<8x286xbf16>
    %8 = vector.extract_strided_slice %2 {offsets = [0, 20], sizes = [8, 286], strides = [1, 1]} : vector<8x324xbf16> to vector<8x286xbf16>
    %9 = vector.extract_strided_slice %2 {offsets = [0, 36], sizes = [8, 286], strides = [1, 1]} : vector<8x324xbf16> to vector<8x286xbf16>
    %10 = vector.extract_strided_slice %2 {offsets = [0, 37], sizes = [8, 286], strides = [1, 1]} : vector<8x324xbf16> to vector<8x286xbf16>
    %11 = vector.extract_strided_slice %2 {offsets = [0, 38], sizes = [8, 286], strides = [1, 1]} : vector<8x324xbf16> to vector<8x286xbf16>
    %12 = tpu.concatenate %3, %4, %5, %6, %7, %8, %9, %10, %11 in 0 : vector<8x286xbf16>, vector<8x286xbf16>, vector<8x286xbf16>, vector<8x286xbf16>, vector<8x286xbf16>, vector<8x286xbf16>, vector<8x286xbf16>, vector<8x286xbf16>, vector<8x286xbf16> -> vector<72x286xbf16>
    %c0_2 = arith.constant 0 : index
    %c0_3 = arith.constant 0 : index
    %13 = vector.load %arg2[%c0_2, %c0_3] : memref<48x72xbf16, #tpu.memory_space<vmem>>, vector<48x72xbf16>
    %cst = arith.constant dense<0.000000e+00> : vector<48x286xf32>
    %14 = tpu.matmul %13, %12, %cst {dimension_numbers = #tpu.dot_dimension_numbers<[1], [0], [0], [1], [0, 0, 1, 1], [], []>} : vector<48x72xbf16>, vector<72x286xbf16>, vector<48x286xf32> -> vector<48x286xf32>
    %c0_4 = arith.constant 0 : index
    %c0_5 = arith.constant 0 : index
    %15 = vector.load %arg3[%c0_4, %c0_5] : memref<48x1xf32, #tpu.memory_space<vmem>>, vector<48x1xf32>
    %16 = vector.broadcast %15 : vector<48x1xf32> to vector<48x286xf32>
    %17 = arith.addf %14, %16 : vector<48x286xf32>
    %cst_6 = arith.constant 0.000000e+00 : f32
    %18 = vector.broadcast %cst_6 : f32 to vector<48x286xf32>
    %19 = arith.maximumf %17, %18 : vector<48x286xf32>
    %c0_7 = arith.constant 0 : index
    %c0_8 = arith.constant 0 : index
    %20 = vector.load %arg6[%c0_7, %c0_8] : memref<1x286xf32, #tpu.memory_space<vmem>>, vector<1x286xf32>
    %21 = vector.broadcast %20 : vector<1x286xf32> to vector<48x286xf32>
    %22 = arith.mulf %19, %21 : vector<48x286xf32>
    %23 = arith.truncf %22 : vector<48x286xf32> to vector<48x286xbf16>
    %cst_9 = arith.constant 0.000000e+00 : bf16
    %24 = vector.broadcast %cst_9 : bf16 to vector<48x19xbf16>
    %25 = tpu.concatenate %24, %23, %24 in 1 : vector<48x19xbf16>, vector<48x286xbf16>, vector<48x19xbf16> -> vector<48x324xbf16>
    %26 = vector.extract_strided_slice %25 {offsets = [0, 0], sizes = [48, 286], strides = [1, 1]} : vector<48x324xbf16> to vector<48x286xbf16>
    %27 = vector.extract_strided_slice %25 {offsets = [0, 1], sizes = [48, 286], strides = [1, 1]} : vector<48x324xbf16> to vector<48x286xbf16>
    %28 = vector.extract_strided_slice %25 {offsets = [0, 2], sizes = [48, 286], strides = [1, 1]} : vector<48x324xbf16> to vector<48x286xbf16>
    %29 = tpu.concatenate %26, %27, %28 in 0 : vector<48x286xbf16>, vector<48x286xbf16>, vector<48x286xbf16> -> vector<144x286xbf16>
    %c0_10 = arith.constant 0 : index
    %c0_11 = arith.constant 0 : index
    %c0_12 = arith.constant 0 : index
    %30 = vector.load %arg4[%c0_10, %c0_11, %c0_12] : memref<3x32x144xbf16, #tpu.memory_space<vmem>>, vector<1x32x144xbf16>
    %31 = vector.shape_cast %30 : vector<1x32x144xbf16> to vector<32x144xbf16>
    %cst_13 = arith.constant dense<0.000000e+00> : vector<32x286xf32>
    %32 = tpu.matmul %31, %29, %cst_13 {dimension_numbers = #tpu.dot_dimension_numbers<[1], [0], [0], [1], [0, 0, 1, 1], [], []>} : vector<32x144xbf16>, vector<144x286xbf16>, vector<32x286xf32> -> vector<32x286xf32>
    %33 = vector.extract_strided_slice %25 {offsets = [0, 18], sizes = [48, 286], strides = [1, 1]} : vector<48x324xbf16> to vector<48x286xbf16>
    %34 = vector.extract_strided_slice %25 {offsets = [0, 19], sizes = [48, 286], strides = [1, 1]} : vector<48x324xbf16> to vector<48x286xbf16>
    %35 = vector.extract_strided_slice %25 {offsets = [0, 20], sizes = [48, 286], strides = [1, 1]} : vector<48x324xbf16> to vector<48x286xbf16>
    %36 = tpu.concatenate %33, %34, %35 in 0 : vector<48x286xbf16>, vector<48x286xbf16>, vector<48x286xbf16> -> vector<144x286xbf16>
    %c1 = arith.constant 1 : index
    %c0_14 = arith.constant 0 : index
    %c0_15 = arith.constant 0 : index
    %37 = vector.load %arg4[%c1, %c0_14, %c0_15] : memref<3x32x144xbf16, #tpu.memory_space<vmem>>, vector<1x32x144xbf16>
    %38 = vector.shape_cast %37 : vector<1x32x144xbf16> to vector<32x144xbf16>
    %cst_16 = arith.constant dense<0.000000e+00> : vector<32x286xf32>
    %39 = tpu.matmul %38, %36, %cst_16 {dimension_numbers = #tpu.dot_dimension_numbers<[1], [0], [0], [1], [0, 0, 1, 1], [], []>} : vector<32x144xbf16>, vector<144x286xbf16>, vector<32x286xf32> -> vector<32x286xf32>
    %40 = arith.addf %32, %39 : vector<32x286xf32>
    %41 = vector.extract_strided_slice %25 {offsets = [0, 36], sizes = [48, 286], strides = [1, 1]} : vector<48x324xbf16> to vector<48x286xbf16>
    %42 = vector.extract_strided_slice %25 {offsets = [0, 37], sizes = [48, 286], strides = [1, 1]} : vector<48x324xbf16> to vector<48x286xbf16>
    %43 = vector.extract_strided_slice %25 {offsets = [0, 38], sizes = [48, 286], strides = [1, 1]} : vector<48x324xbf16> to vector<48x286xbf16>
    %44 = tpu.concatenate %41, %42, %43 in 0 : vector<48x286xbf16>, vector<48x286xbf16>, vector<48x286xbf16> -> vector<144x286xbf16>
    %c2 = arith.constant 2 : index
    %c0_17 = arith.constant 0 : index
    %c0_18 = arith.constant 0 : index
    %45 = vector.load %arg4[%c2, %c0_17, %c0_18] : memref<3x32x144xbf16, #tpu.memory_space<vmem>>, vector<1x32x144xbf16>
    %46 = vector.shape_cast %45 : vector<1x32x144xbf16> to vector<32x144xbf16>
    %cst_19 = arith.constant dense<0.000000e+00> : vector<32x286xf32>
    %47 = tpu.matmul %46, %44, %cst_19 {dimension_numbers = #tpu.dot_dimension_numbers<[1], [0], [0], [1], [0, 0, 1, 1], [], []>} : vector<32x144xbf16>, vector<144x286xbf16>, vector<32x286xf32> -> vector<32x286xf32>
    %48 = arith.addf %40, %47 : vector<32x286xf32>
    %c0_20 = arith.constant 0 : index
    %c0_21 = arith.constant 0 : index
    %49 = vector.load %arg5[%c0_20, %c0_21] : memref<32x1xf32, #tpu.memory_space<vmem>>, vector<32x1xf32>
    %50 = vector.broadcast %49 : vector<32x1xf32> to vector<32x286xf32>
    %51 = arith.addf %48, %50 : vector<32x286xf32>
    %cst_22 = arith.constant 0.000000e+00 : f32
    %52 = vector.broadcast %cst_22 : f32 to vector<32x286xf32>
    %53 = arith.maximumf %51, %52 : vector<32x286xf32>
    %54 = vector.extract_strided_slice %53 {offsets = [0, 0], sizes = [32, 267], strides = [1, 1]} : vector<32x286xf32> to vector<32x267xf32>
    %55 = vector.extract_strided_slice %53 {offsets = [0, 1], sizes = [32, 267], strides = [1, 1]} : vector<32x286xf32> to vector<32x267xf32>
    %56 = arith.maximumf %54, %55 : vector<32x267xf32>
    %57 = vector.extract_strided_slice %53 {offsets = [0, 18], sizes = [32, 267], strides = [1, 1]} : vector<32x286xf32> to vector<32x267xf32>
    %58 = arith.maximumf %56, %57 : vector<32x267xf32>
    %59 = vector.extract_strided_slice %53 {offsets = [0, 19], sizes = [32, 267], strides = [1, 1]} : vector<32x286xf32> to vector<32x267xf32>
    %60 = arith.maximumf %58, %59 : vector<32x267xf32>
    %61 = arith.truncf %60 : vector<32x267xf32> to vector<32x267xbf16>
    %c0_23 = arith.constant 0 : index
    %c0_24 = arith.constant 0 : index
    %62 = vector.load %arg7[%c0_23, %c0_24] : memref<267x128xbf16, #tpu.memory_space<vmem>>, vector<267x128xbf16>
    %cst_25 = arith.constant dense<0.000000e+00> : vector<32x128xf32>
    %63 = tpu.matmul %61, %62, %cst_25 {dimension_numbers = #tpu.dot_dimension_numbers<[1], [0], [0], [1], [0, 0, 1, 1], [], []>} : vector<32x267xbf16>, vector<267x128xbf16>, vector<32x128xf32> -> vector<32x128xf32>
    %c0_26 = arith.constant 0 : index
    %c0_27 = arith.constant 0 : index
    %c0_28 = arith.constant 0 : index
    %64 = vector.load %arg8[%c0_26, %c0_27, %c0_28] : memref<1x32x128xf32, #tpu.memory_space<vmem>>, vector<1x32x128xf32>
    %65 = vector.shape_cast %64 : vector<1x32x128xf32> to vector<32x128xf32>
    %66 = vector.shape_cast %63 : vector<32x128xf32> to vector<1x32x128xf32>
    tpu.vector_store %arg8[%c0_26, %c0_27, %c0_28], %66 {strides = array<i32>} : memref<1x32x128xf32, #tpu.memory_space<vmem>>, vector<1x32x128xf32>,
    return
  }
  func.func @transform_0(%arg0: i32) -> (i32, i32, i32) {
    %c0_i32 = arith.constant 0 : i32
    %c0_i32_0 = arith.constant 0 : i32
    %c0_i32_1 = arith.constant 0 : i32
    return %arg0, %c0_i32, %c0_i32_0 : i32, i32, i32
  }
  func.func @transform_1(%arg0: i32) -> (i32, i32) {
    %c0_i32 = arith.constant 0 : i32
    %c0_i32_0 = arith.constant 0 : i32
    %c0_i32_1 = arith.constant 0 : i32
    return %c0_i32, %c0_i32_0 : i32, i32
  }
  func.func @transform_2(%arg0: i32) -> (i32, i32) {
    %c0_i32 = arith.constant 0 : i32
    %c0_i32_0 = arith.constant 0 : i32
    %c0_i32_1 = arith.constant 0 : i32
    return %c0_i32, %c0_i32_0 : i32, i32
  }
  func.func @transform_3(%arg0: i32) -> (i32, i32, i32) {
    %c0_i32 = arith.constant 0 : i32
    %c0_i32_0 = arith.constant 0 : i32
    %c0_i32_1 = arith.constant 0 : i32
    %c0_i32_2 = arith.constant 0 : i32
    return %c0_i32, %c0_i32_0, %c0_i32_1 : i32, i32, i32
  }
  func.func @transform_4(%arg0: i32) -> (i32, i32) {
    %c0_i32 = arith.constant 0 : i32
    %c0_i32_0 = arith.constant 0 : i32
    %c0_i32_1 = arith.constant 0 : i32
    return %c0_i32, %c0_i32_0 : i32, i32
  }
  func.func @transform_5(%arg0: i32) -> (i32, i32) {
    %c0_i32 = arith.constant 0 : i32
    %c0_i32_0 = arith.constant 0 : i32
    %c0_i32_1 = arith.constant 0 : i32
    return %c0_i32, %c0_i32_0 : i32, i32
  }
  func.func @transform_6(%arg0: i32) -> (i32, i32) {
    %c0_i32 = arith.constant 0 : i32
    %c0_i32_0 = arith.constant 0 : i32
    %c0_i32_1 = arith.constant 0 : i32
    return %c0_i32, %c0_i32_0 : i32, i32
  }
  func.func @transform_7(%arg0: i32) -> (i32, i32, i32) {
    %c0_i32 = arith.constant 0 : i32
    %c0_i32_0 = arith.constant 0 : i32
    %c0_i32_1 = arith.constant 0 : i32
    return %arg0, %c0_i32, %c0_i32_0 : i32, i32, i32
  }
}

</mosaic_0001>

<llo_original>
// kernel: tpu_custom_call.1
$region0: #{tpu_custom_call.1}
  #allocation0 [shape = 'u32[]', space=smem, size = 0x4, offset = 0x4, fixed_abs, tag = 'smem constant byte address 0x4 - core index']
  #allocation1 [shape = 'u32[72,128]{1,0:T(1,128)}', space=vmem, size = 0x9000, scoped, tag = 'internal scratch']
  %s0 = inlined_call_operand.vmem [shape: f32[2,8,324], index: 0, kind: input, shape index: {}]
  %s1 = inlined_call_operand.vmem [shape: bf16[48,72], index: 1, kind: input, shape index: {}]
  %s2 = inlined_call_operand.vmem [shape: f32[48,1], index: 2, kind: input, shape index: {}]
  %s3 = inlined_call_operand.hbm [shape: bf16[3,32,144], index: 3, kind: input, shape index: {}]
  %s4 = inlined_call_operand.vmem [shape: f32[32,1], index: 4, kind: input, shape index: {}]
  %s5 = inlined_call_operand.vmem [shape: f32[1,286], index: 5, kind: input, shape index: {}]
  %s6 = inlined_call_operand.hbm [shape: bf16[267,128], index: 6, kind: input, shape index: {}]
  %s7 = inlined_call_operand.hbm [shape: f32[2,32,128], index: 7, kind: output, shape index: {}]
  %s8 = sld [smem:[#allocation0]]
  $region69: #{tpu_custom_call.1} parent=0
    _
  %s10 = ssub.s32 1, %s8
  %s11 = scalar_select 0, %s10, %s8
  $region1: #{tpu_custom_call.1} parent=0
    #allocation2 [shape = 'u8[49152]{0}', space=vmem, size = 0xc000, scoped, tag = 'input window, operand 3, single buffered']
    #allocation3 [shape = 's32[2]{0}', space=sflag, size = 0x8, scoped, tag = 'scoped memory for tpu_custom_call.1']
    #allocation4 [shape = 's32[2]{0}', space=sflag, size = 0x8, scoped, tag = 'scoped memory for tpu_custom_call.1']
    #allocation5 [shape = 'u8[69632]{0}', space=vmem, size = 0x11000, scoped, tag = 'input window, operand 6, single buffered']
    #allocation6 [shape = 's32[1]{0}', space=sflag, size = 0x4, scoped, tag = 'scoped memory for tpu_custom_call.1']
    #allocation7 [shape = 'u8[32768]{0}', space=vmem, size = 0x8000, scoped, tag = 'output window, operand 0']
    %12 = vsyncpa [#allocation3], 0
    %13 = vsyncpa [#allocation6], 0
    %14 = vsyncpa [#allocation4], 0
    %s15 = scalar_lea.sflag [#allocation4], 1
    %16 = vsyncpa %s15, 0
    loop: start=0, step=1, limit=4
    $region2: #{tpu_custom_call.1} parent=1 // loop_pre_header
      _
    $region3: #{tpu_custom_call.1} parent=1 // loop_header
      %s18 = sphi 0, %s22
      %p19 = scmp.ge.s32.totalorder %s18, 4
      %s28 = sphi 0, %s30
      %s31 = sphi 0, %s28
      %s32 = sphi 0, %s31
      %s48 = sphi 0, %s32
      %s52 = sphi 0, %s52
      %s54 = sphi 0, %s52
      %s55 = sphi 0, %s54
      %s69 = sphi 0, %s55
      %s73 = sphi 0, %s73
      %s75 = sphi 0, %s73
      %s76 = sphi 0, %s75
      %s90 = sphi 0, %s76
      %s94 = sphi 0, %s94
      %s96 = sphi 0, %s94
      %s97 = sphi 0, %s96
      %s111 = sphi 0, %s97
      %s115 = sphi 0, %s115
      %s117 = sphi 0, %s115
      %s118 = sphi 0, %s117
      %s132 = sphi 0, %s118
      %s136 = sphi 0, %s136
      %s138 = sphi 0, %s136
      %s139 = sphi 0, %s138
      %s153 = sphi 0, %s139
      %s157 = sphi 0, %s157
      %s159 = sphi 0, %s157
      %s160 = sphi 0, %s159
      %s174 = sphi 0, %s160
      %s180 = sphi 0, %s182
      %s183 = sphi 0, %s180
      %s184 = sphi 0, %s183
      %s200 = sphi 0, %s184
    $region4: #{tpu_custom_call.1} parent=1 // loop_header_branch
      %21 = sbr.rel (%p19) target = $region8
    $region5: #{tpu_custom_call.1} parent=1 // loop_body
      %s23 = ssub.s32 %s18, 1
      %s24 = ssub.s32 %s18, 2
      %s25 = sadd.s32 %s18, 1
      %s26 = ssub.s32 %s18, %s25
      %p27 = scmp.eq.s32.totalorder %s26, 0
      %s29 = sadd.s32 %s28, 1
      %s30 = scalar_select %p27, %s28, %s29
      %p33 = pneg %p27
      %p34 = scmp.eq.s32.totalorder %s18, 1
      %p35 = por %p33, %p34
      %p36 = scmp.ne.s32.totalorder %s28, %s31
      %p37 = scmp.eq.s32.totalorder %s18, 0
      %p38 = por %p36, %p37
      %p39 = scmp.ne.s32.totalorder %s28, %s31
      %p40 = scmp.eq.s32.totalorder %s23, 1
      %p41 = por %p39, %p40
      %p42 = scmp.ne.s32.totalorder %s31, %s32
      %p43 = scmp.eq.s32.totalorder %s23, 0
      %p44 = por %p42, %p43
      %p45 = scmp.ne.s32.totalorder %s31, %s32
      %p46 = scmp.eq.s32.totalorder %s24, 1
      %p47 = por %p45, %p46
      %p49 = scmp.ne.s32.totalorder %s32, %s48
      %p50 = scmp.eq.s32.totalorder %s24, 0
      %p51 = por %p49, %p50
      %s53 = sadd.s32 %s52, 1
      %p56 = scmp.eq.s32.totalorder %s18, 1
      %p57 = scmp.ne.s32.totalorder %s52, %s54
      %p58 = scmp.eq.s32.totalorder %s18, 0
      %p59 = por %p57, %p58
      %p60 = scmp.ne.s32.totalorder %s52, %s54
      %p61 = scmp.eq.s32.totalorder %s23, 1
      %p62 = por %p60, %p61
      %p63 = scmp.ne.s32.totalorder %s54, %s55
      %p64 = scmp.eq.s32.totalorder %s23, 0
      %p65 = por %p63, %p64
      %p66 = scmp.ne.s32.totalorder %s54, %s55
      %p67 = scmp.eq.s32.totalorder %s24, 1
      %p68 = por %p66, %p67
      %p70 = scmp.ne.s32.totalorder %s55, %s69
      %p71 = scmp.eq.s32.totalorder %s24, 0
      %p72 = por %p70, %p71
      %s74 = sadd.s32 %s73, 1
      %p77 = scmp.eq.s32.totalorder %s18, 1
      %p78 = scmp.ne.s32.totalorder %s73, %s75
      %p79 = scmp.eq.s32.totalorder %s18, 0
      %p80 = por %p78, %p79
      %p81 = scmp.ne.s32.totalorder %s73, %s75
      %p82 = scmp.eq.s32.totalorder %s23, 1
      %p83 = por %p81, %p82
      %p84 = scmp.ne.s32.totalorder %s75, %s76
      %p85 = scmp.eq.s32.totalorder %s23, 0
      %p86 = por %p84, %p85
      %p87 = scmp.ne.s32.totalorder %s75, %s76
      %p88 = scmp.eq.s32.totalorder %s24, 1
      %p89 = por %p87, %p88
      %p91 = scmp.ne.s32.totalorder %s76, %s90
      %p92 = scmp.eq.s32.totalorder %s24, 0
      %p93 = por %p91, %p92
      %s95 = sadd.s32 %s94, 1
      %p98 = scmp.eq.s32.totalorder %s18, 1
      %p99 = scmp.ne.s32.totalorder %s94, %s96
      %p100 = scmp.eq.s32.totalorder %s18, 0
      %p101 = por %p99, %p100
      %p102 = scmp.ne.s32.totalorder %s94, %s96
      %p103 = scmp.eq.s32.totalorder %s23, 1
      %p104 = por %p102, %p103
      %p105 = scmp.ne.s32.totalorder %s96, %s97
      %p106 = scmp.eq.s32.totalorder %s23, 0
      %p107 = por %p105, %p106
      %p108 = scmp.ne.s32.totalorder %s96, %s97
      %p109 = scmp.eq.s32.totalorder %s24, 1
      %p110 = por %p108, %p109
      %p112 = scmp.ne.s32.totalorder %s97, %s111
      %p113 = scmp.eq.s32.totalorder %s24, 0
      %p114 = por %p112, %p113
      %s116 = sadd.s32 %s115, 1
      %p119 = scmp.eq.s32.totalorder %s18, 1
      %p120 = scmp.ne.s32.totalorder %s115, %s117
      %p121 = scmp.eq.s32.totalorder %s18, 0
      %p122 = por %p120, %p121
      %p123 = scmp.ne.s32.totalorder %s115, %s117
      %p124 = scmp.eq.s32.totalorder %s23, 1
      %p125 = por %p123, %p124
      %p126 = scmp.ne.s32.totalorder %s117, %s118
      %p127 = scmp.eq.s32.totalorder %s23, 0
      %p128 = por %p126, %p127
      %p129 = scmp.ne.s32.totalorder %s117, %s118
      %p130 = scmp.eq.s32.totalorder %s24, 1
      %p131 = por %p129, %p130
      %p133 = scmp.ne.s32.totalorder %s118, %s132
      %p134 = scmp.eq.s32.totalorder %s24, 0
      %p135 = por %p133, %p134
      %s137 = sadd.s32 %s136, 1
      %p140 = scmp.eq.s32.totalorder %s18, 1
      %p141 = scmp.ne.s32.totalorder %s136, %s138
      %p142 = scmp.eq.s32.totalorder %s18, 0
      %p143 = por %p141, %p142
      %p144 = scmp.ne.s32.totalorder %s136, %s138
      %p145 = scmp.eq.s32.totalorder %s23, 1
      %p146 = por %p144, %p145
      %p147 = scmp.ne.s32.totalorder %s138, %s139
      %p148 = scmp.eq.s32.totalorder %s23, 0
      %p149 = por %p147, %p148
      %p150 = scmp.ne.s32.totalorder %s138, %s139
      %p151 = scmp.eq.s32.totalorder %s24, 1
      %p152 = por %p150, %p151
      %p154 = scmp.ne.s32.totalorder %s139, %s153
      %p155 = scmp.eq.s32.totalorder %s24, 0
      %p156 = por %p154, %p155
      %s158 = sadd.s32 %s157, 1
      %p161 = scmp.eq.s32.totalorder %s18, 1
      %p162 = scmp.ne.s32.totalorder %s157, %s159
      %p163 = scmp.eq.s32.totalorder %s18, 0
      %p164 = por %p162, %p163
      %p165 = scmp.ne.s32.totalorder %s157, %s159
      %p166 = scmp.eq.s32.totalorder %s23, 1
      %p167 = por %p165, %p166
      %p168 = scmp.ne.s32.totalorder %s159, %s160
      %p169 = scmp.eq.s32.totalorder %s23, 0
      %p170 = por %p168, %p169
      %p171 = scmp.ne.s32.totalorder %s159, %s160
      %p172 = scmp.eq.s32.totalorder %s24, 1
      %p173 = por %p171, %p172
      %p175 = scmp.ne.s32.totalorder %s160, %s174
      %p176 = scmp.eq.s32.totalorder %s24, 0
      %p177 = por %p175, %p176
      %s178 = ssub.s32 %s18, %s25
      %p179 = scmp.eq.s32.totalorder %s178, 0
      %s181 = sadd.s32 %s180, 1
      %s182 = scalar_select %p179, %s180, %s181
      %p185 = pneg %p179
      %p186 = scmp.eq.s32.totalorder %s18, 1
      %p187 = por %p185, %p186
      %p188 = scmp.ne.s32.totalorder %s180, %s183
      %p189 = scmp.eq.s32.totalorder %s18, 0
      %p190 = por %p188, %p189
      %p191 = scmp.ne.s32.totalorder %s180, %s183
      %p192 = scmp.eq.s32.totalorder %s23, 1
      %p193 = por %p191, %p192
      %p194 = scmp.ne.s32.totalorder %s183, %s184
      %p195 = scmp.eq.s32.totalorder %s23, 0
      %p196 = por %p194, %p195
      %p197 = scmp.ne.s32.totalorder %s183, %s184
      %p198 = scmp.eq.s32.totalorder %s24, 1
      %p199 = por %p197, %p198
      %p201 = scmp.ne.s32.totalorder %s184, %s200
      %p202 = scmp.eq.s32.totalorder %s24, 0
      %p203 = por %p201, %p202
      %p204 = scmp.le.s32.totalorder 1, %s18
      %p205 = scmp.lt.s32.totalorder %s18, 3
      %p206 = pnand %p204, %p205
      %p207 = pneg %p206
      // Predicated region
      $region9: #{tpu_custom_call.1} parent=5 // pred_check
        _
      $region10: #{tpu_custom_call.1} parent=5 // pred_check_branch
        %209 = sbr.rel (%p206) target = $region12
      $region11: #{tpu_custom_call.1} parent=5 // pred_region
        %s210 = ssub.s32 %s18, 1
        // Predicated region
        $region13: #{tpu_custom_call.1} parent=11 // pred_check
          %p211 = pneg %p65
        $region14: #{tpu_custom_call.1} parent=11 // pred_check_branch
          %213 = sbr.rel (%p211) target = $region16
        $region15: #{tpu_custom_call.1} parent=11 // pred_region
          _
        $region16: #{tpu_custom_call.1} parent=11 // pred_fallthru
          _
        // Predicated region
        $region17: #{tpu_custom_call.1} parent=11 // pred_check
          %p214 = pneg %p86
        $region18: #{tpu_custom_call.1} parent=11 // pred_check_branch
          %216 = sbr.rel (%p214) target = $region20
        $region19: #{tpu_custom_call.1} parent=11 // pred_region
          _
        $region20: #{tpu_custom_call.1} parent=11 // pred_fallthru
          _
        // Predicated region
        $region21: #{tpu_custom_call.1} parent=11 // pred_check
          %p217 = pneg %p107
        $region22: #{tpu_custom_call.1} parent=11 // pred_check_branch
          %219 = sbr.rel (%p217) target = $region24
        $region23: #{tpu_custom_call.1} parent=11 // pred_region
          %221 = vsyncadd [#allocation3], 0
          %s222 = sshll.u32 %s3, 4
          %s223 = int_to_ptr.hbm [resolvable:$true] %s222
          %s224 = sshll.u32 [#allocation2], 4
          %s225 = int_to_ptr.vmem [resolvable:$true] %s224
          %230 = dma.hbm_to_vmem [thread:$0]  %s223, 1536, %s225, [#allocation3], 128, 128, 8
        $region24: #{tpu_custom_call.1} parent=11 // pred_fallthru
          _
        // Predicated region
        $region25: #{tpu_custom_call.1} parent=11 // pred_check
          %p231 = pneg %p128
        $region26: #{tpu_custom_call.1} parent=11 // pred_check_branch
          %233 = sbr.rel (%p231) target = $region28
        $region27: #{tpu_custom_call.1} parent=11 // pred_region
          _
        $region28: #{tpu_custom_call.1} parent=11 // pred_fallthru
          _
        // Predicated region
        $region29: #{tpu_custom_call.1} parent=11 // pred_check
          %p234 = pneg %p149
        $region30: #{tpu_custom_call.1} parent=11 // pred_check_branch
          %236 = sbr.rel (%p234) target = $region32
        $region31: #{tpu_custom_call.1} parent=11 // pred_region
          _
        $region32: #{tpu_custom_call.1} parent=11 // pred_fallthru
          _
        // Predicated region
        $region33: #{tpu_custom_call.1} parent=11 // pred_check
          %p237 = pneg %p170
        $region34: #{tpu_custom_call.1} parent=11 // pred_check_branch
          %239 = sbr.rel (%p237) target = $region36
        $region35: #{tpu_custom_call.1} parent=11 // pred_region
          %241 = vsyncadd [#allocation6], 0
          %s242 = sshll.u32 %s6, 4
          %s243 = int_to_ptr.hbm [resolvable:$true] %s242
          %s244 = sshll.u32 [#allocation5], 4
          %s245 = int_to_ptr.vmem [resolvable:$true] %s244
          %250 = dma.hbm_to_vmem [thread:$0]  %s243, 2176, %s245, [#allocation6], 64, 64, 4
        $region36: #{tpu_custom_call.1} parent=11 // pred_fallthru
          _
      $region12: #{tpu_custom_call.1} parent=5 // pred_fallthru
        _
      %p251 = scmp.lt.s32.totalorder %s18, 2
      // Predicated region
      $region37: #{tpu_custom_call.1} parent=5 // pred_check
        %p252 = pneg %p251
      $region38: #{tpu_custom_call.1} parent=5 // pred_check_branch
        %254 = sbr.rel (%p252) target = $region40
      $region39: #{tpu_custom_call.1} parent=5 // pred_region
        // Predicated region
        $region41: #{tpu_custom_call.1} parent=39 // pred_check
          %p255 = pneg %p38
        $region42: #{tpu_custom_call.1} parent=39 // pred_check_branch
          %257 = sbr.rel (%p255) target = $region44
        $region43: #{tpu_custom_call.1} parent=39 // pred_region
          %p258 = scmp.lt.s32.totalorder %s18, 1
          %s259 = scalar_select %p258, %s18, 1
          %s260 = smul.addr %s259, 3
          %s261 = smul.addr %s260, 8
          %s262 = scalar_lea.vmem %s0, %s261
        $region44: #{tpu_custom_call.1} parent=39 // pred_fallthru
          _
      $region40: #{tpu_custom_call.1} parent=5 // pred_fallthru
        _
      %p263 = scmp.le.s32.totalorder 1, %s18
      %p264 = scmp.lt.s32.totalorder %s18, 3
      %p265 = pnand %p263, %p264
      %p266 = pneg %p265
      // Predicated region
      $region45: #{tpu_custom_call.1} parent=5 // pred_check
        _
      $region46: #{tpu_custom_call.1} parent=5 // pred_check_branch
        %268 = sbr.rel (%p265) target = $region48
      $region47: #{tpu_custom_call.1} parent=5 // pred_region
        %s269 = ssub.s32 %s18, 1
        // Predicated region
        $region49: #{tpu_custom_call.1} parent=47 // pred_check
          %p270 = pneg %p107
        $region50: #{tpu_custom_call.1} parent=47 // pred_check_branch
          %272 = sbr.rel (%p270) target = $region52
        $region51: #{tpu_custom_call.1} parent=47 // pred_region
          %274 = dma.done [#allocation3], 1536
        $region52: #{tpu_custom_call.1} parent=47 // pred_fallthru
          _
        // Predicated region
        $region53: #{tpu_custom_call.1} parent=47 // pred_check
          %p275 = pneg %p170
        $region54: #{tpu_custom_call.1} parent=47 // pred_check_branch
          %277 = sbr.rel (%p275) target = $region56
        $region55: #{tpu_custom_call.1} parent=47 // pred_region
          %279 = dma.done [#allocation6], 2176
        $region56: #{tpu_custom_call.1} parent=47 // pred_fallthru
          _
        %p280 = scmp.lt.s32.totalorder %s23, 1
        %s281 = scalar_select %p280, %s23, 1
        %s282 = smul.addr %s281, 3
        %s283 = smul.addr %s282, 8
        %s284 = scalar_lea.vmem %s0, %s283
        %p285 = pneg %p44
        %p286 = pneg %p41
        %p287 = pneg %p65
        %p288 = pneg %p62
        %p289 = pneg %p86
        %p290 = pneg %p83
        %p291 = pneg %p107
        %p292 = pneg %p104
        %p293 = pneg %p128
        %p294 = pneg %p125
        %p295 = pneg %p149
        %p296 = pneg %p146
        %p297 = pneg %p170
        %p298 = pneg %p167
        %p299 = pneg %p196
        %p300 = pneg %p193
        %s301 = sand.u32 %s183, 1
        %s302 = scalar_lea.sflag [#allocation4], %s301
        %s303 = sand.u32 %s183, 1
        %s304 = smul.addr %s303, 32
        %s305 = scalar_lea.vmem [#allocation7], %s304
        %p306 = scmp.lt.s32.totalorder %s23, 1
        %s307 = scalar_select %p306, %s23, 1
        %s308 = smul.addr %s307, 3
        %s309 = smul.addr %s308, 8
        %s310 = scalar_lea.vmem %s0, %s309
        %v312 = vld [vmem:[%s310] sm:$0xff]
        %v313 = vld [vmem:[%s310 + $0x8] sm:$0xff]
        %v314 = vld [vmem:[%s310 + $0x10] sm:$0xff]
        %v315 = vpack.c.bf16 %v313, %v312
        %v316 = vpack.c.bf16 %v314, %v314
        %v319 = vunpack.c.l.b16 %v315
        %v320 = vunpack.c.h.b16 %v315
        %v321 = vunpack.c.l.b16 %v316
        %v322 = vpack.c.b16 %v319, %v319
        %v323 = vpack.c.b16 %v320, %v320
        %v324 = vpack.c.b16 %v321, %v321
        %325 = vrot.lane.b32.xlu0 %v322, 127
        %v326 = vpop.permute.xlu0 %325
        %327 = vrot.lane.b32.xlu0 %v323, 127
        %v328 = vpop.permute.xlu0 %327
        %329 = vrot.lane.b32.xlu0 %v324, 127
        %v330 = vpop.permute.xlu0 %329
        %vm331 = vcmask 1039360
        %v332 = vsel %vm331, %v326, %v328
        %v333 = vsel %vm331, %v328, %v330
        %334 = vrot.lane.b32.xlu0 %v322, 126
        %v335 = vpop.permute.xlu0 %334
        %336 = vrot.lane.b32.xlu0 %v323, 126
        %v337 = vpop.permute.xlu0 %336
        %338 = vrot.lane.b32.xlu0 %v324, 126
        %v339 = vpop.permute.xlu0 %338
        %vm340 = vcmask 1031168
        %v341 = vsel %vm340, %v335, %v337
        %v342 = vsel %vm340, %v337, %v339
        %343 = vrot.lane.b32.xlu0 %v322, 110
        %v344 = vpop.permute.xlu0 %343
        %345 = vrot.lane.b32.xlu0 %v323, 110
        %v346 = vpop.permute.xlu0 %345
        %347 = vrot.lane.b32.xlu0 %v324, 110
        %v348 = vpop.permute.xlu0 %347
        %vm349 = vcmask 900096
        %v350 = vsel %vm349, %v344, %v346
        %v351 = vsel %vm349, %v346, %v348
        %352 = vrot.lane.b32.xlu0 %v322, 109
        %v353 = vpop.permute.xlu0 %352
        %354 = vrot.lane.b32.xlu0 %v323, 109
        %v355 = vpop.permute.xlu0 %354
        %356 = vrot.lane.b32.xlu0 %v324, 109
        %v357 = vpop.permute.xlu0 %356
        %vm358 = vcmask 891904
        %v359 = vsel %vm358, %v353, %v355
        %v360 = vsel %vm358, %v355, %v357
        %361 = vrot.lane.b32.xlu0 %v322, 108
        %v362 = vpop.permute.xlu0 %361
        %363 = vrot.lane.b32.xlu0 %v323, 108
        %v364 = vpop.permute.xlu0 %363
        %365 = vrot.lane.b32.xlu0 %v324, 108
        %v366 = vpop.permute.xlu0 %365
        %vm367 = vcmask 883712
        %v368 = vsel %vm367, %v362, %v364
        %v369 = vsel %vm367, %v364, %v366
        %370 = vrot.lane.b32.xlu0 %v322, 92
        %v371 = vpop.permute.xlu0 %370
        %372 = vrot.lane.b32.xlu0 %v323, 92
        %v373 = vpop.permute.xlu0 %372
        %374 = vrot.lane.b32.xlu0 %v324, 92
        %v375 = vpop.permute.xlu0 %374
        %vm376 = vcmask 752640
        %v377 = vsel %vm376, %v371, %v373
        %v378 = vsel %vm376, %v373, %v375
        %379 = vrot.lane.b32.xlu0 %v322, 91
        %v380 = vpop.permute.xlu0 %379
        %381 = vrot.lane.b32.xlu0 %v323, 91
        %v382 = vpop.permute.xlu0 %381
        %383 = vrot.lane.b32.xlu0 %v324, 91
        %v384 = vpop.permute.xlu0 %383
        %vm385 = vcmask 744448
        %v386 = vsel %vm385, %v380, %v382
        %v387 = vsel %vm385, %v382, %v384
        %388 = vrot.lane.b32.xlu0 %v322, 90
        %v389 = vpop.permute.xlu0 %388
        %390 = vrot.lane.b32.xlu0 %v323, 90
        %v391 = vpop.permute.xlu0 %390
        %392 = vrot.lane.b32.xlu0 %v324, 90
        %v393 = vpop.permute.xlu0 %392
        %vm394 = vcmask 736256
        %v395 = vsel %vm394, %v389, %v391
        %v396 = vsel %vm394, %v391, %v393
        %vm397 = vcmask 1043456
        %v400 = vsel %vm397, %v322, %v332
        %v404 = vsel %vm397, %v323, %v333
        %v408 = vsel %vm397, %v324, %v330
        %v412 = vsel %vm397, %v341, %v350
        %v416 = vsel %vm397, %v342, %v351
        %v420 = vsel %vm397, %v339, %v348
        %v424 = vsel %vm397, %v359, %v368
        %v428 = vsel %vm397, %v360, %v369
        %v432 = vsel %vm397, %v357, %v366
        %v436 = vsel %vm397, %v377, %v386
        %v440 = vsel %vm397, %v378, %v387
        %v444 = vsel %vm397, %v375, %v384
        %v446 = vld [vmem:[%s1] sm:$0xf]
        %v447 = vld [vmem:[%s1 + $0x4] sm:$0xf]
        %v448 = vld [vmem:[%s1 + $0x8] sm:$0xf]
        %v449 = vld [vmem:[%s1 + $0xc] sm:$0xf]
        %v450 = vld [vmem:[%s1 + $0x10] sm:$0xf]
        %v451 = vld [vmem:[%s1 + $0x14] sm:$0xf]
        %v452 = vld [vmem:[%s2] sm:$0xff]
        %v453 = vld [vmem:[%s2 + $0x8] sm:$0xff]
        %v454 = vld [vmem:[%s2 + $0x10] sm:$0xff]
        %v455 = vld [vmem:[%s2 + $0x18] sm:$0xff]
        %v456 = vld [vmem:[%s2 + $0x20] sm:$0xff]
        %v457 = vld [vmem:[%s2 + $0x28] sm:$0xff]
        %459 = vset.pattern.permute.xlu0 0
        %460 = vperm.xlu0 %459, %v452
        %v461 = vpop.permute.xlu0 %460
        %464 = vset.pattern.permute.xlu0 0
        %465 = vperm.xlu0 %464, %v453
        %v466 = vpop.permute.xlu0 %465
        %469 = vset.pattern.permute.xlu0 0
        %470 = vperm.xlu0 %469, %v454
        %v471 = vpop.permute.xlu0 %470
        %474 = vset.pattern.permute.xlu0 0
        %475 = vperm.xlu0 %474, %v455
        %v476 = vpop.permute.xlu0 %475
        %479 = vset.pattern.permute.xlu0 0
        %480 = vperm.xlu0 %479, %v456
        %v481 = vpop.permute.xlu0 %480
        %484 = vset.pattern.permute.xlu0 0
        %485 = vperm.xlu0 %484, %v457
        %v486 = vpop.permute.xlu0 %485
        %v494 = vunpack.c.l.b16 %v446
        %v495 = vunpack.c.l.b16 %v447
        %v496 = vunpack.c.l.b16 %v448
        %v497 = vunpack.c.l.b16 %v449
        %v498 = vunpack.c.l.b16 %v450
        %v499 = vunpack.c.l.b16 %v451
        %v500 = vpack.c.b16 %v495, %v494
        %v501 = vpack.c.b16 %v497, %v496
        %v502 = vpack.c.b16 %v499, %v498
        %vm503 = vcmask 588800
        %v505 = vsel %vm503, %v500, 0
        %v508 = vsel %vm503, %v501, 0
        %v511 = vsel %vm503, %v502, 0
        %v514 = vsel %vm397, %v395, 0
        %v517 = vsel %vm397, %v396, 0
        %v520 = vsel %vm397, %v393, 0
        %522 = vmatpush.bf16.msra.mxu0 0
        %523 = vmatpush.bf16.msra.mxu0 0
        %524 = vmatpush.bf16.msra.mxu0 0
        %525 = vmatpush.bf16.msra.mxu0 %v514
        %526 = vmatpush.bf16.msra.mxu0 %v436
        %527 = vmatpush.bf16.msra.mxu0 %v424
        %528 = vmatpush.bf16.msra.mxu0 %v412
        %529 = vmatpush.bf16.msra.mxu0 %v400
        %530 = vmatmul.bf16.gmra.mxu0 %v505
        %v531 = vpop.f32.mrf.mxu0
        %v532 = vadd.f32 %v461, %v531
        %v533 = vpop.f32.mrf.mxu0
        %v534 = vadd.f32 %v466, %v533
        %535 = vmatmul.bf16.gmra.mxu0 %v508
        %v536 = vpop.f32.mrf.mxu0
        %v537 = vadd.f32 %v471, %v536
        %v538 = vpop.f32.mrf.mxu0
        %v539 = vadd.f32 %v476, %v538
        %540 = vmatmul.bf16.gmra.mxu0 %v511
        %v541 = vpop.f32.mrf.mxu0
        %v542 = vadd.f32 %v481, %v541
        %v543 = vpop.f32.mrf.mxu0
        %v544 = vadd.f32 %v486, %v543
        %545 = vdwg.mxu0
        %546 = vmatpush.bf16.msra.mxu0 0
        %547 = vmatpush.bf16.msra.mxu0 0
        %548 = vmatpush.bf16.msra.mxu0 0
        %549 = vmatpush.bf16.msra.mxu0 %v517
        %550 = vmatpush.bf16.msra.mxu0 %v440
        %551 = vmatpush.bf16.msra.mxu0 %v428
        %552 = vmatpush.bf16.msra.mxu0 %v416
        %553 = vmatpush.bf16.msra.mxu0 %v404
        %554 = vmatmul.bf16.gmra.mxu0 %v505
        %v555 = vpop.f32.mrf.mxu0
        %v556 = vadd.f32 %v461, %v555
        %v557 = vpop.f32.mrf.mxu0
        %v558 = vadd.f32 %v466, %v557
        %559 = vmatmul.bf16.gmra.mxu0 %v508
        %v560 = vpop.f32.mrf.mxu0
        %v561 = vadd.f32 %v471, %v560
        %v562 = vpop.f32.mrf.mxu0
        %v563 = vadd.f32 %v476, %v562
        %564 = vmatmul.bf16.gmra.mxu0 %v511
        %v565 = vpop.f32.mrf.mxu0
        %v566 = vadd.f32 %v481, %v565
        %v567 = vpop.f32.mrf.mxu0
        %v568 = vadd.f32 %v486, %v567
        %569 = vdwg.mxu0
        %570 = vmatpush.bf16.msra.mxu0 0
        %571 = vmatpush.bf16.msra.mxu0 0
        %572 = vmatpush.bf16.msra.mxu0 0
        %573 = vmatpush.bf16.msra.mxu0 %v520
        %574 = vmatpush.bf16.msra.mxu0 %v444
        %575 = vmatpush.bf16.msra.mxu0 %v432
        %576 = vmatpush.bf16.msra.mxu0 %v420
        %577 = vmatpush.bf16.msra.mxu0 %v408
        %578 = vmatmul.bf16.gmra.mxu0 %v505
        %v579 = vpop.f32.mrf.mxu0
        %v580 = vadd.f32 %v461, %v579
        %v581 = vpop.f32.mrf.mxu0
        %v582 = vadd.f32 %v466, %v581
        %583 = vmatmul.bf16.gmra.mxu0 %v508
        %v584 = vpop.f32.mrf.mxu0
        %v585 = vadd.f32 %v471, %v584
        %v586 = vpop.f32.mrf.mxu0
        %v587 = vadd.f32 %v476, %v586
        %588 = vmatmul.bf16.gmra.mxu0 %v511
        %v589 = vpop.f32.mrf.mxu0
        %v590 = vadd.f32 %v481, %v589
        %v591 = vpop.f32.mrf.mxu0
        %v592 = vadd.f32 %v486, %v591
        %593 = vdwg.mxu0
        %v594 = vmax.f32 %v532, 0.0
        %v595 = vmax.f32 %v556, 0.0
        %v596 = vmax.f32 %v580, 0.0
        %v597 = vmax.f32 %v534, 0.0
        %v598 = vmax.f32 %v558, 0.0
        %v599 = vmax.f32 %v582, 0.0
        %v600 = vmax.f32 %v537, 0.0
        %v601 = vmax.f32 %v561, 0.0
        %v602 = vmax.f32 %v585, 0.0
        %v603 = vmax.f32 %v539, 0.0
        %v604 = vmax.f32 %v563, 0.0
        %v605 = vmax.f32 %v587, 0.0
        %v606 = vmax.f32 %v542, 0.0
        %v607 = vmax.f32 %v566, 0.0
        %v608 = vmax.f32 %v590, 0.0
        %v609 = vmax.f32 %v544, 0.0
        %v610 = vmax.f32 %v568, 0.0
        %v611 = vmax.f32 %v592, 0.0
        %v612 = vld [vmem:[%s5] sm:$0x7]
        %v614 = vperm.slane %v612, 0
        %v615 = vperm.slane %v612, 1
        %v616 = vperm.slane %v612, 2
        %v620 = vmul.f32 %v594, %v614
        %v621 = vmul.f32 %v595, %v615
        %v622 = vmul.f32 %v596, %v616
        %v623 = vmul.f32 %v597, %v614
        %v624 = vmul.f32 %v598, %v615
        %v625 = vmul.f32 %v599, %v616
        %v626 = vmul.f32 %v600, %v614
        %v627 = vmul.f32 %v601, %v615
        %v628 = vmul.f32 %v602, %v616
        %v629 = vmul.f32 %v603, %v614
        %v630 = vmul.f32 %v604, %v615
        %v631 = vmul.f32 %v605, %v616
        %v632 = vmul.f32 %v606, %v614
        %v633 = vmul.f32 %v607, %v615
        %v634 = vmul.f32 %v608, %v616
        %v635 = vmul.f32 %v609, %v614
        %v636 = vmul.f32 %v610, %v615
        %v637 = vmul.f32 %v611, %v616
        %v638 = vpack.c.bf16 %v621, %v620
        %v639 = vpack.c.bf16 %v622, %v622
        %v640 = vpack.c.bf16 %v624, %v623
        %v641 = vpack.c.bf16 %v625, %v625
        %v642 = vpack.c.bf16 %v627, %v626
        %v643 = vpack.c.bf16 %v628, %v628
        %v644 = vpack.c.bf16 %v630, %v629
        %v645 = vpack.c.bf16 %v631, %v631
        %v646 = vpack.c.bf16 %v633, %v632
        %v647 = vpack.c.bf16 %v634, %v634
        %v648 = vpack.c.bf16 %v636, %v635
        %v649 = vpack.c.bf16 %v637, %v637
        %v662 = vunpack.c.l.b16 %v638
        %v663 = vunpack.c.h.b16 %v638
        %v664 = vunpack.c.l.b16 %v639
        %v665 = vunpack.c.l.b16 %v640
        %v666 = vunpack.c.h.b16 %v640
        %v667 = vunpack.c.l.b16 %v641
        %v668 = vunpack.c.l.b16 %v642
        %v669 = vunpack.c.h.b16 %v642
        %v670 = vunpack.c.l.b16 %v643
        %v671 = vunpack.c.l.b16 %v644
        %v672 = vunpack.c.h.b16 %v644
        %v673 = vunpack.c.l.b16 %v645
        %v674 = vunpack.c.l.b16 %v646
        %v675 = vunpack.c.h.b16 %v646
        %v676 = vunpack.c.l.b16 %v647
        %v677 = vunpack.c.l.b16 %v648
        %v678 = vunpack.c.h.b16 %v648
        %v679 = vunpack.c.l.b16 %v649
        %v680 = vpack.c.b16 %v665, %v662
        %v681 = vpack.c.b16 %v666, %v663
        %v682 = vpack.c.b16 %v667, %v664
        %v683 = vpack.c.b16 %v671, %v668
        %v684 = vpack.c.b16 %v672, %v669
        %v685 = vpack.c.b16 %v673, %v670
        %v686 = vpack.c.b16 %v677, %v674
        %v687 = vpack.c.b16 %v678, %v675
        %v688 = vpack.c.b16 %v679, %v676
        %689 = vrot.lane.b32.xlu0 %v680, 19
        %v690 = vpop.permute.xlu0 %689
        %691 = vrot.lane.b32.xlu0 %v681, 19
        %v692 = vpop.permute.xlu0 %691
        %693 = vrot.lane.b32.xlu0 %v682, 19
        %v694 = vpop.permute.xlu0 %693
        %695 = vrot.lane.b32.xlu0 %v683, 19
        %v696 = vpop.permute.xlu0 %695
        %697 = vrot.lane.b32.xlu0 %v684, 19
        %v698 = vpop.permute.xlu0 %697
        %699 = vrot.lane.b32.xlu0 %v685, 19
        %v700 = vpop.permute.xlu0 %699
        %701 = vrot.lane.b32.xlu0 %v686, 19
        %v702 = vpop.permute.xlu0 %701
        %703 = vrot.lane.b32.xlu0 %v687, 19
        %v704 = vpop.permute.xlu0 %703
        %705 = vrot.lane.b32.xlu0 %v688, 19
        %v706 = vpop.permute.xlu0 %705
        %vm707 = vcmask 154624
        %v708 = vsel %vm707, %v690, %v692
        %v709 = vsel %vm707, %v692, %v694
        %v710 = vsel %vm707, %v696, %v698
        %v711 = vsel %vm707, %v698, %v700
        %v712 = vsel %vm707, %v702, %v704
        %v713 = vsel %vm707, %v704, %v706
        %vm717 = vcmask 154624
        %v720 = vsel %vm717, 0, %v690
        %v723 = vsel %vm717, 0, %v696
        %v726 = vsel %vm717, 0, %v702
        %vm728 = vcmask 400384
        %v730 = vsel %vm728, %v709, 0
        %v733 = vsel %vm728, %v711, 0
        %v736 = vsel %vm728, %v713, 0
        %744 = vrot.lane.b32.xlu0 %v720, 127
        %v745 = vpop.permute.xlu0 %744
        %746 = vrot.lane.b32.xlu0 %v708, 127
        %v747 = vpop.permute.xlu0 %746
        %748 = vrot.lane.b32.xlu0 %v730, 127
        %v749 = vpop.permute.xlu0 %748
        %750 = vrot.lane.b32.xlu0 %v723, 127
        %v751 = vpop.permute.xlu0 %750
        %752 = vrot.lane.b32.xlu0 %v710, 127
        %v753 = vpop.permute.xlu0 %752
        %754 = vrot.lane.b32.xlu0 %v733, 127
        %v755 = vpop.permute.xlu0 %754
        %756 = vrot.lane.b32.xlu0 %v726, 127
        %v757 = vpop.permute.xlu0 %756
        %758 = vrot.lane.b32.xlu0 %v712, 127
        %v759 = vpop.permute.xlu0 %758
        %760 = vrot.lane.b32.xlu0 %v736, 127
        %v761 = vpop.permute.xlu0 %760
        %v762 = vsel %vm331, %v745, %v747
        %v763 = vsel %vm331, %v747, %v749
        %v764 = vsel %vm331, %v751, %v753
        %v765 = vsel %vm331, %v753, %v755
        %v766 = vsel %vm331, %v757, %v759
        %v767 = vsel %vm331, %v759, %v761
        %777 = vrot.lane.b32.xlu0 %v720, 126
        %v778 = vpop.permute.xlu0 %777
        %779 = vrot.lane.b32.xlu0 %v708, 126
        %v780 = vpop.permute.xlu0 %779
        %781 = vrot.lane.b32.xlu0 %v730, 126
        %v782 = vpop.permute.xlu0 %781
        %783 = vrot.lane.b32.xlu0 %v723, 126
        %v784 = vpop.permute.xlu0 %783
        %785 = vrot.lane.b32.xlu0 %v710, 126
        %v786 = vpop.permute.xlu0 %785
        %787 = vrot.lane.b32.xlu0 %v733, 126
        %v788 = vpop.permute.xlu0 %787
        %789 = vrot.lane.b32.xlu0 %v726, 126
        %v790 = vpop.permute.xlu0 %789
        %791 = vrot.lane.b32.xlu0 %v712, 126
        %v792 = vpop.permute.xlu0 %791
        %793 = vrot.lane.b32.xlu0 %v736, 126
        %v794 = vpop.permute.xlu0 %793
        %v795 = vsel %vm340, %v778, %v780
        %v796 = vsel %vm340, %v780, %v782
        %v797 = vsel %vm340, %v784, %v786
        %v798 = vsel %vm340, %v786, %v788
        %v799 = vsel %vm340, %v790, %v792
        %v800 = vsel %vm340, %v792, %v794
        %v810 = vld [vmem:[#allocation2] sm:$0xff]
        %v811 = vld [vmem:[#allocation2 + $0x8] sm:$0xff]
        %v812 = vld [vmem:[#allocation2 + $0x10] sm:$0xff]
        %v813 = vld [vmem:[#allocation2 + $0x18] sm:$0xff]
        %s814 = scalar_lea.vmem [#allocation2], 32
        %v815 = vld [vmem:[%s814] sm:$0xff]
        %v816 = vld [vmem:[%s814 + $0x8] sm:$0xff]
        %v817 = vld [vmem:[%s814 + $0x10] sm:$0xff]
        %v818 = vld [vmem:[%s814 + $0x18] sm:$0xff]
        %v823 = vunpack.c.l.b16 %v815
        %v824 = vunpack.c.h.b16 %v815
        %v825 = vunpack.c.l.b16 %v816
        %v826 = vunpack.c.h.b16 %v816
        %v827 = vunpack.c.l.b16 %v817
        %v828 = vunpack.c.h.b16 %v817
        %v829 = vunpack.c.l.b16 %v818
        %v830 = vunpack.c.h.b16 %v818
        %v831 = vpack.c.b16 %v825, %v823
        %v832 = vpack.c.b16 %v826, %v824
        %v833 = vpack.c.b16 %v829, %v827
        %v834 = vpack.c.b16 %v830, %v828
        %837 = vrot.lane.b32.xlu0 %v720, 110
        %v838 = vpop.permute.xlu0 %837
        %839 = vrot.lane.b32.xlu0 %v708, 110
        %v840 = vpop.permute.xlu0 %839
        %841 = vrot.lane.b32.xlu0 %v730, 110
        %v842 = vpop.permute.xlu0 %841
        %843 = vrot.lane.b32.xlu0 %v723, 110
        %v844 = vpop.permute.xlu0 %843
        %845 = vrot.lane.b32.xlu0 %v710, 110
        %v846 = vpop.permute.xlu0 %845
        %847 = vrot.lane.b32.xlu0 %v733, 110
        %v848 = vpop.permute.xlu0 %847
        %849 = vrot.lane.b32.xlu0 %v726, 110
        %v850 = vpop.permute.xlu0 %849
        %851 = vrot.lane.b32.xlu0 %v712, 110
        %v852 = vpop.permute.xlu0 %851
        %853 = vrot.lane.b32.xlu0 %v736, 110
        %v854 = vpop.permute.xlu0 %853
        %855 = vrot.lane.b32.xlu0 %v762, 110
        %v856 = vpop.permute.xlu0 %855
        %857 = vrot.lane.b32.xlu0 %v763, 110
        %v858 = vpop.permute.xlu0 %857
        %859 = vrot.lane.b32.xlu0 %v749, 110
        %v860 = vpop.permute.xlu0 %859
        %861 = vrot.lane.b32.xlu0 %v764, 110
        %v862 = vpop.permute.xlu0 %861
        %863 = vrot.lane.b32.xlu0 %v765, 110
        %v864 = vpop.permute.xlu0 %863
        %865 = vrot.lane.b32.xlu0 %v755, 110
        %v866 = vpop.permute.xlu0 %865
        %867 = vrot.lane.b32.xlu0 %v766, 110
        %v868 = vpop.permute.xlu0 %867
        %869 = vrot.lane.b32.xlu0 %v767, 110
        %v870 = vpop.permute.xlu0 %869
        %871 = vrot.lane.b32.xlu0 %v761, 110
        %v872 = vpop.permute.xlu0 %871
        %873 = vrot.lane.b32.xlu0 %v795, 110
        %v874 = vpop.permute.xlu0 %873
        %875 = vrot.lane.b32.xlu0 %v796, 110
        %v876 = vpop.permute.xlu0 %875
        %877 = vrot.lane.b32.xlu0 %v782, 110
        %v878 = vpop.permute.xlu0 %877
        %879 = vrot.lane.b32.xlu0 %v797, 110
        %v880 = vpop.permute.xlu0 %879
        %881 = vrot.lane.b32.xlu0 %v798, 110
        %v882 = vpop.permute.xlu0 %881
        %883 = vrot.lane.b32.xlu0 %v788, 110
        %v884 = vpop.permute.xlu0 %883
        %885 = vrot.lane.b32.xlu0 %v799, 110
        %v886 = vpop.permute.xlu0 %885
        %887 = vrot.lane.b32.xlu0 %v800, 110
        %v888 = vpop.permute.xlu0 %887
        %889 = vrot.lane.b32.xlu0 %v794, 110
        %v890 = vpop.permute.xlu0 %889
        %v891 = vsel %vm349, %v838, %v840
        %v892 = vsel %vm349, %v840, %v842
        %v893 = vsel %vm349, %v844, %v846
        %v894 = vsel %vm349, %v846, %v848
        %v895 = vsel %vm349, %v850, %v852
        %v896 = vsel %vm349, %v852, %v854
        %v897 = vsel %vm349, %v856, %v858
        %v898 = vsel %vm349, %v858, %v860
        %v899 = vsel %vm349, %v862, %v864
        %v900 = vsel %vm349, %v864, %v866
        %v901 = vsel %vm349, %v868, %v870
        %v902 = vsel %vm349, %v870, %v872
        %v903 = vsel %vm349, %v874, %v876
        %v904 = vsel %vm349, %v876, %v878
        %v905 = vsel %vm349, %v880, %v882
        %v906 = vsel %vm349, %v882, %v884
        %v907 = vsel %vm349, %v886, %v888
        %v908 = vsel %vm349, %v888, %v890
        %vm936 = vcmask 130048
        %v938 = vsel %vm936, %v832, 0
        %v941 = vsel %vm936, %v834, 0
        %943 = vmatpush.bf16.msra.mxu0 %v905
        %944 = vmatpush.bf16.msra.mxu0 %v903
        %945 = vmatpush.bf16.msra.mxu0 %v901
        %946 = vmatpush.bf16.msra.mxu0 %v899
        %947 = vmatpush.bf16.msra.mxu0 %v897
        %948 = vmatpush.bf16.msra.mxu0 %v895
        %949 = vmatpush.bf16.msra.mxu0 %v893
        %950 = vmatpush.bf16.msra.mxu0 %v891
        %951 = vmatmul.bf16.gmra.mxu0 %v831
        %v952 = vpop.f32.mrf.mxu0
        %v953 = vadd.f32 0.0, %v952
        %v954 = vpop.f32.mrf.mxu0
        %v955 = vadd.f32 0.0, %v954
        %956 = vmatmul.bf16.gmra.mxu0 %v833
        %v957 = vpop.f32.mrf.mxu0
        %v958 = vadd.f32 0.0, %v957
        %v959 = vpop.f32.mrf.mxu0
        %v960 = vadd.f32 0.0, %v959
        %961 = vdwg.mxu0
        %962 = vmatpush.bf16.msra.mxu0 0
        %963 = vmatpush.bf16.msra.mxu0 0
        %964 = vmatpush.bf16.msra.mxu0 0
        %965 = vmatpush.bf16.msra.mxu0 0
        %966 = vmatpush.bf16.msra.mxu0 0
        %967 = vmatpush.bf16.msra.mxu0 0
        %968 = vmatpush.bf16.msra.mxu0 0
        %969 = vmatpush.bf16.msra.mxu0 %v907
        %970 = vmatmul.bf16.gmra.mxu0 %v938
        %v971 = vpop.f32.mrf.mxu0
        %v972 = vadd.f32 %v953, %v971
        %v973 = vpop.f32.mrf.mxu0
        %v974 = vadd.f32 %v955, %v973
        %975 = vmatmul.bf16.gmra.mxu0 %v941
        %v976 = vpop.f32.mrf.mxu0
        %v977 = vadd.f32 %v958, %v976
        %v978 = vpop.f32.mrf.mxu0
        %v979 = vadd.f32 %v960, %v978
        %980 = vdwg.mxu0
        %981 = vmatpush.bf16.msra.mxu0 %v906
        %982 = vmatpush.bf16.msra.mxu0 %v904
        %983 = vmatpush.bf16.msra.mxu0 %v902
        %984 = vmatpush.bf16.msra.mxu0 %v900
        %985 = vmatpush.bf16.msra.mxu0 %v898
        %986 = vmatpush.bf16.msra.mxu0 %v896
        %987 = vmatpush.bf16.msra.mxu0 %v894
        %988 = vmatpush.bf16.msra.mxu0 %v892
        %989 = vmatmul.bf16.gmra.mxu0 %v831
        %v990 = vpop.f32.mrf.mxu0
        %v991 = vadd.f32 0.0, %v990
        %v992 = vpop.f32.mrf.mxu0
        %v993 = vadd.f32 0.0, %v992
        %994 = vmatmul.bf16.gmra.mxu0 %v833
        %v995 = vpop.f32.mrf.mxu0
        %v996 = vadd.f32 0.0, %v995
        %v997 = vpop.f32.mrf.mxu0
        %v998 = vadd.f32 0.0, %v997
        %999 = vdwg.mxu0
        %1000 = vmatpush.bf16.msra.mxu0 0
        %1001 = vmatpush.bf16.msra.mxu0 0
        %1002 = vmatpush.bf16.msra.mxu0 0
        %1003 = vmatpush.bf16.msra.mxu0 0
        %1004 = vmatpush.bf16.msra.mxu0 0
        %1005 = vmatpush.bf16.msra.mxu0 0
        %1006 = vmatpush.bf16.msra.mxu0 0
        %1007 = vmatpush.bf16.msra.mxu0 %v908
        %1008 = vmatmul.bf16.gmra.mxu0 %v938
        %v1009 = vpop.f32.mrf.mxu0
        %v1010 = vadd.f32 %v991, %v1009
        %v1011 = vpop.f32.mrf.mxu0
        %v1012 = vadd.f32 %v993, %v1011
        %1013 = vmatmul.bf16.gmra.mxu0 %v941
        %v1014 = vpop.f32.mrf.mxu0
        %v1015 = vadd.f32 %v996, %v1014
        %v1016 = vpop.f32.mrf.mxu0
        %v1017 = vadd.f32 %v998, %v1016
        %1018 = vdwg.mxu0
        %1019 = vmatpush.bf16.msra.mxu0 %v884
        %1020 = vmatpush.bf16.msra.mxu0 %v878
        %1021 = vmatpush.bf16.msra.mxu0 %v872
        %1022 = vmatpush.bf16.msra.mxu0 %v866
        %1023 = vmatpush.bf16.msra.mxu0 %v860
        %1024 = vmatpush.bf16.msra.mxu0 %v854
        %1025 = vmatpush.bf16.msra.mxu0 %v848
        %1026 = vmatpush.bf16.msra.mxu0 %v842
        %1027 = vmatmul.bf16.gmra.mxu0 %v831
        %v1028 = vpop.f32.mrf.mxu0
        %v1029 = vadd.f32 0.0, %v1028
        %v1030 = vpop.f32.mrf.mxu0
        %v1031 = vadd.f32 0.0, %v1030
        %1032 = vmatmul.bf16.gmra.mxu0 %v833
        %v1033 = vpop.f32.mrf.mxu0
        %v1034 = vadd.f32 0.0, %v1033
        %v1035 = vpop.f32.mrf.mxu0
        %v1036 = vadd.f32 0.0, %v1035
        %1037 = vdwg.mxu0
        %1038 = vmatpush.bf16.msra.mxu0 0
        %1039 = vmatpush.bf16.msra.mxu0 0
        %1040 = vmatpush.bf16.msra.mxu0 0
        %1041 = vmatpush.bf16.msra.mxu0 0
        %1042 = vmatpush.bf16.msra.mxu0 0
        %1043 = vmatpush.bf16.msra.mxu0 0
        %1044 = vmatpush.bf16.msra.mxu0 0
        %1045 = vmatpush.bf16.msra.mxu0 %v890
        %1046 = vmatmul.bf16.gmra.mxu0 %v938
        %v1047 = vpop.f32.mrf.mxu0
        %v1048 = vadd.f32 %v1029, %v1047
        %v1049 = vpop.f32.mrf.mxu0
        %v1050 = vadd.f32 %v1031, %v1049
        %1051 = vmatmul.bf16.gmra.mxu0 %v941
        %v1052 = vpop.f32.mrf.mxu0
        %v1053 = vadd.f32 %v1034, %v1052
        %v1054 = vpop.f32.mrf.mxu0
        %v1055 = vadd.f32 %v1036, %v1054
        %1056 = vdwg.mxu0
        %v1061 = vunpack.c.l.b16 %v810
        %v1062 = vunpack.c.h.b16 %v810
        %v1063 = vunpack.c.l.b16 %v811
        %v1064 = vunpack.c.h.b16 %v811
        %v1065 = vunpack.c.l.b16 %v812
        %v1066 = vunpack.c.h.b16 %v812
        %v1067 = vunpack.c.l.b16 %v813
        %v1068 = vunpack.c.h.b16 %v813
        %v1069 = vpack.c.b16 %v1063, %v1061
        %v1070 = vpack.c.b16 %v1064, %v1062
        %v1071 = vpack.c.b16 %v1067, %v1065
        %v1072 = vpack.c.b16 %v1068, %v1066
        %v1076 = vsel %vm936, %v1070, 0
        %v1079 = vsel %vm936, %v1072, 0
        %1081 = vmatpush.bf16.msra.mxu0 %v797
        %1082 = vmatpush.bf16.msra.mxu0 %v795
        %1083 = vmatpush.bf16.msra.mxu0 %v766
        %1084 = vmatpush.bf16.msra.mxu0 %v764
        %1085 = vmatpush.bf16.msra.mxu0 %v762
        %1086 = vmatpush.bf16.msra.mxu0 %v726
        %1087 = vmatpush.bf16.msra.mxu0 %v723
        %1088 = vmatpush.bf16.msra.mxu0 %v720
        %1089 = vmatmul.bf16.gmra.mxu0 %v1069
        %v1090 = vpop.f32.mrf.mxu0
        %v1091 = vadd.f32 %v972, %v1090
        %v1092 = vpop.f32.mrf.mxu0
        %v1093 = vadd.f32 %v974, %v1092
        %1094 = vmatmul.bf16.gmra.mxu0 %v1071
        %v1095 = vpop.f32.mrf.mxu0
        %v1096 = vadd.f32 %v977, %v1095
        %v1097 = vpop.f32.mrf.mxu0
        %v1098 = vadd.f32 %v979, %v1097
        %1099 = vdwg.mxu0
        %1100 = vmatpush.bf16.msra.mxu0 0
        %1101 = vmatpush.bf16.msra.mxu0 0
        %1102 = vmatpush.bf16.msra.mxu0 0
        %1103 = vmatpush.bf16.msra.mxu0 0
        %1104 = vmatpush.bf16.msra.mxu0 0
        %1105 = vmatpush.bf16.msra.mxu0 0
        %1106 = vmatpush.bf16.msra.mxu0 0
        %1107 = vmatpush.bf16.msra.mxu0 %v799
        %1108 = vmatmul.bf16.gmra.mxu0 %v1076
        %v1109 = vpop.f32.mrf.mxu0
        %v1110 = vadd.f32 %v1091, %v1109
        %v1111 = vpop.f32.mrf.mxu0
        %v1112 = vadd.f32 %v1093, %v1111
        %1113 = vmatmul.bf16.gmra.mxu0 %v1079
        %v1114 = vpop.f32.mrf.mxu0
        %v1115 = vadd.f32 %v1096, %v1114
        %v1116 = vpop.f32.mrf.mxu0
        %v1117 = vadd.f32 %v1098, %v1116
        %1118 = vdwg.mxu0
        %1119 = vmatpush.bf16.msra.mxu0 %v798
        %1120 = vmatpush.bf16.msra.mxu0 %v796
        %1121 = vmatpush.bf16.msra.mxu0 %v767
        %1122 = vmatpush.bf16.msra.mxu0 %v765
        %1123 = vmatpush.bf16.msra.mxu0 %v763
        %1124 = vmatpush.bf16.msra.mxu0 %v712
        %1125 = vmatpush.bf16.msra.mxu0 %v710
        %1126 = vmatpush.bf16.msra.mxu0 %v708
        %1127 = vmatmul.bf16.gmra.mxu0 %v1069
        %v1128 = vpop.f32.mrf.mxu0
        %v1129 = vadd.f32 %v1010, %v1128
        %v1130 = vpop.f32.mrf.mxu0
        %v1131 = vadd.f32 %v1012, %v1130
        %1132 = vmatmul.bf16.gmra.mxu0 %v1071
        %v1133 = vpop.f32.mrf.mxu0
        %v1134 = vadd.f32 %v1015, %v1133
        %v1135 = vpop.f32.mrf.mxu0
        %v1136 = vadd.f32 %v1017, %v1135
        %1137 = vdwg.mxu0
        %1138 = vmatpush.bf16.msra.mxu0 0
        %1139 = vmatpush.bf16.msra.mxu0 0
        %1140 = vmatpush.bf16.msra.mxu0 0
        %1141 = vmatpush.bf16.msra.mxu0 0
        %1142 = vmatpush.bf16.msra.mxu0 0
        %1143 = vmatpush.bf16.msra.mxu0 0
        %1144 = vmatpush.bf16.msra.mxu0 0
        %1145 = vmatpush.bf16.msra.mxu0 %v800
        %1146 = vmatmul.bf16.gmra.mxu0 %v1076
        %v1147 = vpop.f32.mrf.mxu0
        %v1148 = vadd.f32 %v1129, %v1147
        %v1149 = vpop.f32.mrf.mxu0
        %v1150 = vadd.f32 %v1131, %v1149
        %1151 = vmatmul.bf16.gmra.mxu0 %v1079
        %v1152 = vpop.f32.mrf.mxu0
        %v1153 = vadd.f32 %v1134, %v1152
        %v1154 = vpop.f32.mrf.mxu0
        %v1155 = vadd.f32 %v1136, %v1154
        %1156 = vdwg.mxu0
        %1157 = vmatpush.bf16.msra.mxu0 %v788
        %1158 = vmatpush.bf16.msra.mxu0 %v782
        %1159 = vmatpush.bf16.msra.mxu0 %v761
        %1160 = vmatpush.bf16.msra.mxu0 %v755
        %1161 = vmatpush.bf16.msra.mxu0 %v749
        %1162 = vmatpush.bf16.msra.mxu0 %v736
        %1163 = vmatpush.bf16.msra.mxu0 %v733
        %1164 = vmatpush.bf16.msra.mxu0 %v730
        %1165 = vmatmul.bf16.gmra.mxu0 %v1069
        %v1166 = vpop.f32.mrf.mxu0
        %v1167 = vadd.f32 %v1048, %v1166
        %v1168 = vpop.f32.mrf.mxu0
        %v1169 = vadd.f32 %v1050, %v1168
        %1170 = vmatmul.bf16.gmra.mxu0 %v1071
        %v1171 = vpop.f32.mrf.mxu0
        %v1172 = vadd.f32 %v1053, %v1171
        %v1173 = vpop.f32.mrf.mxu0
        %v1174 = vadd.f32 %v1055, %v1173
        %1175 = vdwg.mxu0
        %1176 = vmatpush.bf16.msra.mxu0 0
        %1177 = vmatpush.bf16.msra.mxu0 0
        %1178 = vmatpush.bf16.msra.mxu0 0
        %1179 = vmatpush.bf16.msra.mxu0 0
        %1180 = vmatpush.bf16.msra.mxu0 0
        %1181 = vmatpush.bf16.msra.mxu0 0
        %1182 = vmatpush.bf16.msra.mxu0 0
        %1183 = vmatpush.bf16.msra.mxu0 %v794
        %1184 = vmatmul.bf16.gmra.mxu0 %v1076
        %v1185 = vpop.f32.mrf.mxu0
        %v1186 = vadd.f32 %v1167, %v1185
        %v1187 = vpop.f32.mrf.mxu0
        %v1188 = vadd.f32 %v1169, %v1187
        %1189 = vmatmul.bf16.gmra.mxu0 %v1079
        %v1190 = vpop.f32.mrf.mxu0
        %v1191 = vadd.f32 %v1172, %v1190
        %v1192 = vpop.f32.mrf.mxu0
        %v1193 = vadd.f32 %v1174, %v1192
        %1194 = vdwg.mxu0
        %s1195 = scalar_lea.vmem [#allocation2], 64
        %v1196 = vld [vmem:[%s1195] sm:$0xff]
        %v1197 = vld [vmem:[%s1195 + $0x8] sm:$0xff]
        %v1198 = vld [vmem:[%s1195 + $0x10] sm:$0xff]
        %v1199 = vld [vmem:[%s1195 + $0x18] sm:$0xff]
        %v1204 = vunpack.c.l.b16 %v1196
        %v1205 = vunpack.c.h.b16 %v1196
        %v1206 = vunpack.c.l.b16 %v1197
        %v1207 = vunpack.c.h.b16 %v1197
        %v1208 = vunpack.c.l.b16 %v1198
        %v1209 = vunpack.c.h.b16 %v1198
        %v1210 = vunpack.c.l.b16 %v1199
        %v1211 = vunpack.c.h.b16 %v1199
        %v1212 = vpack.c.b16 %v1206, %v1204
        %v1213 = vpack.c.b16 %v1207, %v1205
        %v1214 = vpack.c.b16 %v1210, %v1208
        %v1215 = vpack.c.b16 %v1211, %v1209
        %1218 = vrot.lane.b32.xlu0 %v720, 92
        %v1219 = vpop.permute.xlu0 %1218
        %1220 = vrot.lane.b32.xlu0 %v708, 92
        %v1221 = vpop.permute.xlu0 %1220
        %1222 = vrot.lane.b32.xlu0 %v730, 92
        %v1223 = vpop.permute.xlu0 %1222
        %1224 = vrot.lane.b32.xlu0 %v723, 92
        %v1225 = vpop.permute.xlu0 %1224
        %1226 = vrot.lane.b32.xlu0 %v710, 92
        %v1227 = vpop.permute.xlu0 %1226
        %1228 = vrot.lane.b32.xlu0 %v733, 92
        %v1229 = vpop.permute.xlu0 %1228
        %1230 = vrot.lane.b32.xlu0 %v726, 92
        %v1231 = vpop.permute.xlu0 %1230
        %1232 = vrot.lane.b32.xlu0 %v712, 92
        %v1233 = vpop.permute.xlu0 %1232
        %1234 = vrot.lane.b32.xlu0 %v736, 92
        %v1235 = vpop.permute.xlu0 %1234
        %1236 = vrot.lane.b32.xlu0 %v762, 92
        %v1237 = vpop.permute.xlu0 %1236
        %1238 = vrot.lane.b32.xlu0 %v763, 92
        %v1239 = vpop.permute.xlu0 %1238
        %1240 = vrot.lane.b32.xlu0 %v749, 92
        %v1241 = vpop.permute.xlu0 %1240
        %1242 = vrot.lane.b32.xlu0 %v764, 92
        %v1243 = vpop.permute.xlu0 %1242
        %1244 = vrot.lane.b32.xlu0 %v765, 92
        %v1245 = vpop.permute.xlu0 %1244
        %1246 = vrot.lane.b32.xlu0 %v755, 92
        %v1247 = vpop.permute.xlu0 %1246
        %1248 = vrot.lane.b32.xlu0 %v766, 92
        %v1249 = vpop.permute.xlu0 %1248
        %1250 = vrot.lane.b32.xlu0 %v767, 92
        %v1251 = vpop.permute.xlu0 %1250
        %1252 = vrot.lane.b32.xlu0 %v761, 92
        %v1253 = vpop.permute.xlu0 %1252
        %1254 = vrot.lane.b32.xlu0 %v795, 92
        %v1255 = vpop.permute.xlu0 %1254
        %1256 = vrot.lane.b32.xlu0 %v796, 92
        %v1257 = vpop.permute.xlu0 %1256
        %1258 = vrot.lane.b32.xlu0 %v782, 92
        %v1259 = vpop.permute.xlu0 %1258
        %1260 = vrot.lane.b32.xlu0 %v797, 92
        %v1261 = vpop.permute.xlu0 %1260
        %1262 = vrot.lane.b32.xlu0 %v798, 92
        %v1263 = vpop.permute.xlu0 %1262
        %1264 = vrot.lane.b32.xlu0 %v788, 92
        %v1265 = vpop.permute.xlu0 %1264
        %1266 = vrot.lane.b32.xlu0 %v799, 92
        %v1267 = vpop.permute.xlu0 %1266
        %1268 = vrot.lane.b32.xlu0 %v800, 92
        %v1269 = vpop.permute.xlu0 %1268
        %1270 = vrot.lane.b32.xlu0 %v794, 92
        %v1271 = vpop.permute.xlu0 %1270
        %v1272 = vsel %vm376, %v1219, %v1221
        %v1273 = vsel %vm376, %v1221, %v1223
        %v1274 = vsel %vm376, %v1225, %v1227
        %v1275 = vsel %vm376, %v1227, %v1229
        %v1276 = vsel %vm376, %v1231, %v1233
        %v1277 = vsel %vm376, %v1233, %v1235
        %v1278 = vsel %vm376, %v1237, %v1239
        %v1279 = vsel %vm376, %v1239, %v1241
        %v1280 = vsel %vm376, %v1243, %v1245
        %v1281 = vsel %vm376, %v1245, %v1247
        %v1282 = vsel %vm376, %v1249, %v1251
        %v1283 = vsel %vm376, %v1251, %v1253
        %v1284 = vsel %vm376, %v1255, %v1257
        %v1285 = vsel %vm376, %v1257, %v1259
        %v1286 = vsel %vm376, %v1261, %v1263
        %v1287 = vsel %vm376, %v1263, %v1265
        %v1288 = vsel %vm376, %v1267, %v1269
        %v1289 = vsel %vm376, %v1269, %v1271
        %v1318 = vsel %vm936, %v1213, 0
        %v1321 = vsel %vm936, %v1215, 0
        %1323 = vmatpush.bf16.msra.mxu0 %v1286
        %1324 = vmatpush.bf16.msra.mxu0 %v1284
        %1325 = vmatpush.bf16.msra.mxu0 %v1282
        %1326 = vmatpush.bf16.msra.mxu0 %v1280
        %1327 = vmatpush.bf16.msra.mxu0 %v1278
        %1328 = vmatpush.bf16.msra.mxu0 %v1276
        %1329 = vmatpush.bf16.msra.mxu0 %v1274
        %1330 = vmatpush.bf16.msra.mxu0 %v1272
        %1331 = vmatmul.bf16.gmra.mxu0 %v1212
        %v1332 = vpop.f32.mrf.mxu0
        %v1333 = vadd.f32 0.0, %v1332
        %v1334 = vpop.f32.mrf.mxu0
        %v1335 = vadd.f32 0.0, %v1334
        %1336 = vmatmul.bf16.gmra.mxu0 %v1214
        %v1337 = vpop.f32.mrf.mxu0
        %v1338 = vadd.f32 0.0, %v1337
        %v1339 = vpop.f32.mrf.mxu0
        %v1340 = vadd.f32 0.0, %v1339
        %1341 = vdwg.mxu0
        %1342 = vmatpush.bf16.msra.mxu0 0
        %1343 = vmatpush.bf16.msra.mxu0 0
        %1344 = vmatpush.bf16.msra.mxu0 0
        %1345 = vmatpush.bf16.msra.mxu0 0
        %1346 = vmatpush.bf16.msra.mxu0 0
        %1347 = vmatpush.bf16.msra.mxu0 0
        %1348 = vmatpush.bf16.msra.mxu0 0
        %1349 = vmatpush.bf16.msra.mxu0 %v1288
        %1350 = vmatmul.bf16.gmra.mxu0 %v1318
        %v1351 = vpop.f32.mrf.mxu0
        %v1352 = vadd.f32 %v1333, %v1351
        %v1353 = vpop.f32.mrf.mxu0
        %v1354 = vadd.f32 %v1335, %v1353
        %1355 = vmatmul.bf16.gmra.mxu0 %v1321
        %v1356 = vpop.f32.mrf.mxu0
        %v1357 = vadd.f32 %v1338, %v1356
        %v1358 = vpop.f32.mrf.mxu0
        %v1359 = vadd.f32 %v1340, %v1358
        %1360 = vdwg.mxu0
        %1361 = vmatpush.bf16.msra.mxu0 %v1287
        %1362 = vmatpush.bf16.msra.mxu0 %v1285
        %1363 = vmatpush.bf16.msra.mxu0 %v1283
        %1364 = vmatpush.bf16.msra.mxu0 %v1281
        %1365 = vmatpush.bf16.msra.mxu0 %v1279
        %1366 = vmatpush.bf16.msra.mxu0 %v1277
        %1367 = vmatpush.bf16.msra.mxu0 %v1275
        %1368 = vmatpush.bf16.msra.mxu0 %v1273
        %1369 = vmatmul.bf16.gmra.mxu0 %v1212
        %v1370 = vpop.f32.mrf.mxu0
        %v1371 = vadd.f32 0.0, %v1370
        %v1372 = vpop.f32.mrf.mxu0
        %v1373 = vadd.f32 0.0, %v1372
        %1374 = vmatmul.bf16.gmra.mxu0 %v1214
        %v1375 = vpop.f32.mrf.mxu0
        %v1376 = vadd.f32 0.0, %v1375
        %v1377 = vpop.f32.mrf.mxu0
        %v1378 = vadd.f32 0.0, %v1377
        %1379 = vdwg.mxu0
        %1380 = vmatpush.bf16.msra.mxu0 0
        %1381 = vmatpush.bf16.msra.mxu0 0
        %1382 = vmatpush.bf16.msra.mxu0 0
        %1383 = vmatpush.bf16.msra.mxu0 0
        %1384 = vmatpush.bf16.msra.mxu0 0
        %1385 = vmatpush.bf16.msra.mxu0 0
        %1386 = vmatpush.bf16.msra.mxu0 0
        %1387 = vmatpush.bf16.msra.mxu0 %v1289
        %1388 = vmatmul.bf16.gmra.mxu0 %v1318
        %v1389 = vpop.f32.mrf.mxu0
        %v1390 = vadd.f32 %v1371, %v1389
        %v1391 = vpop.f32.mrf.mxu0
        %v1392 = vadd.f32 %v1373, %v1391
        %1393 = vmatmul.bf16.gmra.mxu0 %v1321
        %v1394 = vpop.f32.mrf.mxu0
        %v1395 = vadd.f32 %v1376, %v1394
        %v1396 = vpop.f32.mrf.mxu0
        %v1397 = vadd.f32 %v1378, %v1396
        %1398 = vdwg.mxu0
        %1399 = vmatpush.bf16.msra.mxu0 %v1265
        %1400 = vmatpush.bf16.msra.mxu0 %v1259
        %1401 = vmatpush.bf16.msra.mxu0 %v1253
        %1402 = vmatpush.bf16.msra.mxu0 %v1247
        %1403 = vmatpush.bf16.msra.mxu0 %v1241
        %1404 = vmatpush.bf16.msra.mxu0 %v1235
        %1405 = vmatpush.bf16.msra.mxu0 %v1229
        %1406 = vmatpush.bf16.msra.mxu0 %v1223
        %1407 = vmatmul.bf16.gmra.mxu0 %v1212
        %v1408 = vpop.f32.mrf.mxu0
        %v1409 = vadd.f32 0.0, %v1408
        %v1410 = vpop.f32.mrf.mxu0
        %v1411 = vadd.f32 0.0, %v1410
        %1412 = vmatmul.bf16.gmra.mxu0 %v1214
        %v1413 = vpop.f32.mrf.mxu0
        %v1414 = vadd.f32 0.0, %v1413
        %v1415 = vpop.f32.mrf.mxu0
        %v1416 = vadd.f32 0.0, %v1415
        %1417 = vdwg.mxu0
        %1418 = vmatpush.bf16.msra.mxu0 0
        %1419 = vmatpush.bf16.msra.mxu0 0
        %1420 = vmatpush.bf16.msra.mxu0 0
        %1421 = vmatpush.bf16.msra.mxu0 0
        %1422 = vmatpush.bf16.msra.mxu0 0
        %1423 = vmatpush.bf16.msra.mxu0 0
        %1424 = vmatpush.bf16.msra.mxu0 0
        %1425 = vmatpush.bf16.msra.mxu0 %v1271
        %1426 = vmatmul.bf16.gmra.mxu0 %v1318
        %v1427 = vpop.f32.mrf.mxu0
        %v1428 = vadd.f32 %v1409, %v1427
        %v1429 = vpop.f32.mrf.mxu0
        %v1430 = vadd.f32 %v1411, %v1429
        %1431 = vmatmul.bf16.gmra.mxu0 %v1321
        %v1432 = vpop.f32.mrf.mxu0
        %v1433 = vadd.f32 %v1414, %v1432
        %v1434 = vpop.f32.mrf.mxu0
        %v1435 = vadd.f32 %v1416, %v1434
        %1436 = vdwg.mxu0
        %v1437 = vadd.f32 %v1110, %v1352
        %v1438 = vadd.f32 %v1148, %v1390
        %v1439 = vadd.f32 %v1186, %v1428
        %v1440 = vadd.f32 %v1112, %v1354
        %v1441 = vadd.f32 %v1150, %v1392
        %v1442 = vadd.f32 %v1188, %v1430
        %v1443 = vadd.f32 %v1115, %v1357
        %v1444 = vadd.f32 %v1153, %v1395
        %v1445 = vadd.f32 %v1191, %v1433
        %v1446 = vadd.f32 %v1117, %v1359
        %v1447 = vadd.f32 %v1155, %v1397
        %v1448 = vadd.f32 %v1193, %v1435
        %v1449 = vld [vmem:[%s4] sm:$0xff]
        %v1450 = vld [vmem:[%s4 + $0x8] sm:$0xff]
        %v1451 = vld [vmem:[%s4 + $0x10] sm:$0xff]
        %v1452 = vld [vmem:[%s4 + $0x18] sm:$0xff]
        %1454 = vset.pattern.permute.xlu0 0
        %1455 = vperm.xlu0 %1454, %v1449
        %v1456 = vpop.permute.xlu0 %1455
        %1459 = vset.pattern.permute.xlu0 0
        %1460 = vperm.xlu0 %1459, %v1450
        %v1461 = vpop.permute.xlu0 %1460
        %1464 = vset.pattern.permute.xlu0 0
        %1465 = vperm.xlu0 %1464, %v1451
        %v1466 = vpop.permute.xlu0 %1465
        %1469 = vset.pattern.permute.xlu0 0
        %1470 = vperm.xlu0 %1469, %v1452
        %v1471 = vpop.permute.xlu0 %1470
        %v1473 = vadd.f32 %v1437, %v1456
        %v1474 = vadd.f32 %v1438, %v1456
        %v1475 = vadd.f32 %v1439, %v1456
        %v1476 = vadd.f32 %v1440, %v1461
        %v1477 = vadd.f32 %v1441, %v1461
        %v1478 = vadd.f32 %v1442, %v1461
        %v1479 = vadd.f32 %v1443, %v1466
        %v1480 = vadd.f32 %v1444, %v1466
        %v1481 = vadd.f32 %v1445, %v1466
        %v1482 = vadd.f32 %v1446, %v1471
        %v1483 = vadd.f32 %v1447, %v1471
        %v1484 = vadd.f32 %v1448, %v1471
        %v1485 = vmax.f32 %v1473, 0.0
        %v1486 = vmax.f32 %v1474, 0.0
        %v1487 = vmax.f32 %v1475, 0.0
        %v1488 = vmax.f32 %v1476, 0.0
        %v1489 = vmax.f32 %v1477, 0.0
        %v1490 = vmax.f32 %v1478, 0.0
        %v1491 = vmax.f32 %v1479, 0.0
        %v1492 = vmax.f32 %v1480, 0.0
        %v1493 = vmax.f32 %v1481, 0.0
        %v1494 = vmax.f32 %v1482, 0.0
        %v1495 = vmax.f32 %v1483, 0.0
        %v1496 = vmax.f32 %v1484, 0.0
        %1509 = vrot.lane.b32.xlu0 %v1485, 127
        %v1510 = vpop.permute.xlu0 %1509
        %1511 = vrot.lane.b32.xlu0 %v1486, 127
        %v1512 = vpop.permute.xlu0 %1511
        %1513 = vrot.lane.b32.xlu0 %v1487, 127
        %v1514 = vpop.permute.xlu0 %1513
        %1515 = vrot.lane.b32.xlu0 %v1488, 127
        %v1516 = vpop.permute.xlu0 %1515
        %1517 = vrot.lane.b32.xlu0 %v1489, 127
        %v1518 = vpop.permute.xlu0 %1517
        %1519 = vrot.lane.b32.xlu0 %v1490, 127
        %v1520 = vpop.permute.xlu0 %1519
        %1521 = vrot.lane.b32.xlu0 %v1491, 127
        %v1522 = vpop.permute.xlu0 %1521
        %1523 = vrot.lane.b32.xlu0 %v1492, 127
        %v1524 = vpop.permute.xlu0 %1523
        %1525 = vrot.lane.b32.xlu0 %v1493, 127
        %v1526 = vpop.permute.xlu0 %1525
        %1527 = vrot.lane.b32.xlu0 %v1494, 127
        %v1528 = vpop.permute.xlu0 %1527
        %1529 = vrot.lane.b32.xlu0 %v1495, 127
        %v1530 = vpop.permute.xlu0 %1529
        %1531 = vrot.lane.b32.xlu0 %v1496, 127
        %v1532 = vpop.permute.xlu0 %1531
        %vm1533 = vcmask 1039360
        %v1534 = vsel %vm1533, %v1510, %v1512
        %v1535 = vsel %vm1533, %v1512, %v1514
        %v1536 = vsel %vm1533, %v1516, %v1518
        %v1537 = vsel %vm1533, %v1518, %v1520
        %v1538 = vsel %vm1533, %v1522, %v1524
        %v1539 = vsel %vm1533, %v1524, %v1526
        %v1540 = vsel %vm1533, %v1528, %v1530
        %v1541 = vsel %vm1533, %v1530, %v1532
        %v1554 = vmax.f32 %v1485, %v1534
        %v1555 = vmax.f32 %v1486, %v1535
        %v1556 = vmax.f32 %v1487, %v1514
        %v1557 = vmax.f32 %v1488, %v1536
        %v1558 = vmax.f32 %v1489, %v1537
        %v1559 = vmax.f32 %v1490, %v1520
        %v1560 = vmax.f32 %v1491, %v1538
        %v1561 = vmax.f32 %v1492, %v1539
        %v1562 = vmax.f32 %v1493, %v1526
        %v1563 = vmax.f32 %v1494, %v1540
        %v1564 = vmax.f32 %v1495, %v1541
        %v1565 = vmax.f32 %v1496, %v1532
        %1566 = vrot.lane.b32.xlu0 %v1485, 110
        %v1567 = vpop.permute.xlu0 %1566
        %1568 = vrot.lane.b32.xlu0 %v1486, 110
        %v1569 = vpop.permute.xlu0 %1568
        %1570 = vrot.lane.b32.xlu0 %v1487, 110
        %v1571 = vpop.permute.xlu0 %1570
        %1572 = vrot.lane.b32.xlu0 %v1488, 110
        %v1573 = vpop.permute.xlu0 %1572
        %1574 = vrot.lane.b32.xlu0 %v1489, 110
        %v1575 = vpop.permute.xlu0 %1574
        %1576 = vrot.lane.b32.xlu0 %v1490, 110
        %v1577 = vpop.permute.xlu0 %1576
        %1578 = vrot.lane.b32.xlu0 %v1491, 110
        %v1579 = vpop.permute.xlu0 %1578
        %1580 = vrot.lane.b32.xlu0 %v1492, 110
        %v1581 = vpop.permute.xlu0 %1580
        %1582 = vrot.lane.b32.xlu0 %v1493, 110
        %v1583 = vpop.permute.xlu0 %1582
        %1584 = vrot.lane.b32.xlu0 %v1494, 110
        %v1585 = vpop.permute.xlu0 %1584
        %1586 = vrot.lane.b32.xlu0 %v1495, 110
        %v1587 = vpop.permute.xlu0 %1586
        %1588 = vrot.lane.b32.xlu0 %v1496, 110
        %v1589 = vpop.permute.xlu0 %1588
        %vm1590 = vcmask 900096
        %v1591 = vsel %vm1590, %v1567, %v1569
        %v1592 = vsel %vm1590, %v1569, %v1571
        %v1593 = vsel %vm1590, %v1573, %v1575
        %v1594 = vsel %vm1590, %v1575, %v1577
        %v1595 = vsel %vm1590, %v1579, %v1581
        %v1596 = vsel %vm1590, %v1581, %v1583
        %v1597 = vsel %vm1590, %v1585, %v1587
        %v1598 = vsel %vm1590, %v1587, %v1589
        %v1611 = vmax.f32 %v1554, %v1591
        %v1612 = vmax.f32 %v1555, %v1592
        %v1613 = vmax.f32 %v1556, %v1571
        %v1614 = vmax.f32 %v1557, %v1593
        %v1615 = vmax.f32 %v1558, %v1594
        %v1616 = vmax.f32 %v1559, %v1577
        %v1617 = vmax.f32 %v1560, %v1595
        %v1618 = vmax.f32 %v1561, %v1596
        %v1619 = vmax.f32 %v1562, %v1583
        %v1620 = vmax.f32 %v1563, %v1597
        %v1621 = vmax.f32 %v1564, %v1598
        %v1622 = vmax.f32 %v1565, %v1589
        %1623 = vrot.lane.b32.xlu0 %v1485, 109
        %v1624 = vpop.permute.xlu0 %1623
        %1625 = vrot.lane.b32.xlu0 %v1486, 109
        %v1626 = vpop.permute.xlu0 %1625
        %1627 = vrot.lane.b32.xlu0 %v1487, 109
        %v1628 = vpop.permute.xlu0 %1627
        %1629 = vrot.lane.b32.xlu0 %v1488, 109
        %v1630 = vpop.permute.xlu0 %1629
        %1631 = vrot.lane.b32.xlu0 %v1489, 109
        %v1632 = vpop.permute.xlu0 %1631
        %1633 = vrot.lane.b32.xlu0 %v1490, 109
        %v1634 = vpop.permute.xlu0 %1633
        %1635 = vrot.lane.b32.xlu0 %v1491, 109
        %v1636 = vpop.permute.xlu0 %1635
        %1637 = vrot.lane.b32.xlu0 %v1492, 109
        %v1638 = vpop.permute.xlu0 %1637
        %1639 = vrot.lane.b32.xlu0 %v1493, 109
        %v1640 = vpop.permute.xlu0 %1639
        %1641 = vrot.lane.b32.xlu0 %v1494, 109
        %v1642 = vpop.permute.xlu0 %1641
        %1643 = vrot.lane.b32.xlu0 %v1495, 109
        %v1644 = vpop.permute.xlu0 %1643
        %1645 = vrot.lane.b32.xlu0 %v1496, 109
        %v1646 = vpop.permute.xlu0 %1645
        %vm1647 = vcmask 891904
        %v1648 = vsel %vm1647, %v1624, %v1626
        %v1649 = vsel %vm1647, %v1626, %v1628
        %v1650 = vsel %vm1647, %v1630, %v1632
        %v1651 = vsel %vm1647, %v1632, %v1634
        %v1652 = vsel %vm1647, %v1636, %v1638
        %v1653 = vsel %vm1647, %v1638, %v1640
        %v1654 = vsel %vm1647, %v1642, %v1644
        %v1655 = vsel %vm1647, %v1644, %v1646
        %v1668 = vmax.f32 %v1611, %v1648
        %v1669 = vmax.f32 %v1612, %v1649
        %v1670 = vmax.f32 %v1613, %v1628
        %v1671 = vmax.f32 %v1614, %v1650
        %v1672 = vmax.f32 %v1615, %v1651
        %v1673 = vmax.f32 %v1616, %v1634
        %v1674 = vmax.f32 %v1617, %v1652
        %v1675 = vmax.f32 %v1618, %v1653
        %v1676 = vmax.f32 %v1619, %v1640
        %v1677 = vmax.f32 %v1620, %v1654
        %v1678 = vmax.f32 %v1621, %v1655
        %v1679 = vmax.f32 %v1622, %v1646
        %v1680 = vpack.c.bf16 %v1671, %v1668
        %v1681 = vpack.c.bf16 %v1672, %v1669
        %v1682 = vpack.c.bf16 %v1673, %v1670
        %v1683 = vpack.c.bf16 %v1677, %v1674
        %v1684 = vpack.c.bf16 %v1678, %v1675
        %v1685 = vpack.c.bf16 %v1679, %v1676
        %v1686 = vld [vmem:[#allocation5] sm:$0xf]
        %v1687 = vld [vmem:[#allocation5 + $0x4] sm:$0xf]
        %v1688 = vld [vmem:[#allocation5 + $0x8] sm:$0xf]
        %v1689 = vld [vmem:[#allocation5 + $0xc] sm:$0xf]
        %v1690 = vld [vmem:[#allocation5 + $0x10] sm:$0xf]
        %v1691 = vld [vmem:[#allocation5 + $0x14] sm:$0xf]
        %v1692 = vld [vmem:[#allocation5 + $0x18] sm:$0xf]
        %v1693 = vld [vmem:[#allocation5 + $0x1c] sm:$0xf]
        %v1694 = vld [vmem:[#allocation5 + $0x20] sm:$0xf]
        %v1695 = vld [vmem:[#allocation5 + $0x24] sm:$0xf]
        %v1696 = vld [vmem:[#allocation5 + $0x28] sm:$0xf]
        %v1697 = vld [vmem:[#allocation5 + $0x2c] sm:$0xf]
        %v1698 = vld [vmem:[#allocation5 + $0x30] sm:$0xf]
        %v1699 = vld [vmem:[#allocation5 + $0x34] sm:$0xf]
        %v1700 = vld [vmem:[#allocation5 + $0x38] sm:$0xf]
        %v1701 = vld [vmem:[#allocation5 + $0x3c] sm:$0xf]
        %v1702 = vld [vmem:[#allocation5 + $0x40] sm:$0xf]
        %v1703 = vld [vmem:[#allocation5 + $0x44] sm:$0xf]
        %v1704 = vld [vmem:[#allocation5 + $0x48] sm:$0xf]
        %v1705 = vld [vmem:[#allocation5 + $0x4c] sm:$0xf]
        %v1706 = vld [vmem:[#allocation5 + $0x50] sm:$0xf]
        %v1707 = vld [vmem:[#allocation5 + $0x54] sm:$0xf]
        %v1708 = vld [vmem:[#allocation5 + $0x58] sm:$0xf]
        %v1709 = vld [vmem:[#allocation5 + $0x5c] sm:$0xf]
        %v1710 = vld [vmem:[#allocation5 + $0x60] sm:$0xf]
        %v1711 = vld [vmem:[#allocation5 + $0x64] sm:$0xf]
        %v1712 = vld [vmem:[#allocation5 + $0x68] sm:$0xf]
        %v1713 = vld [vmem:[#allocation5 + $0x6c] sm:$0xf]
        %v1714 = vld [vmem:[#allocation5 + $0x70] sm:$0xf]
        %v1715 = vld [vmem:[#allocation5 + $0x74] sm:$0xf]
        %v1716 = vld [vmem:[#allocation5 + $0x78] sm:$0xf]
        %v1717 = vld [vmem:[#allocation5 + $0x7c] sm:$0xf]
        %v1718 = vld [vmem:[#allocation5 + $0x80] sm:$0xf]
        %v1719 = vld [vmem:[#allocation5 + $0x84] sm:$0x3]
        %v1754 = vunpack.c.l.b16 %v1686
        %v1755 = vunpack.c.l.b16 %v1687
        %v1756 = vunpack.c.l.b16 %v1688
        %v1757 = vunpack.c.l.b16 %v1689
        %v1758 = vunpack.c.l.b16 %v1690
        %v1759 = vunpack.c.l.b16 %v1691
        %v1760 = vunpack.c.l.b16 %v1692
        %v1761 = vunpack.c.l.b16 %v1693
        %v1762 = vunpack.c.l.b16 %v1694
        %v1763 = vunpack.c.l.b16 %v1695
        %v1764 = vunpack.c.l.b16 %v1696
        %v1765 = vunpack.c.l.b16 %v1697
        %v1766 = vunpack.c.l.b16 %v1698
        %v1767 = vunpack.c.l.b16 %v1699
        %v1768 = vunpack.c.l.b16 %v1700
        %v1769 = vunpack.c.l.b16 %v1701
        %v1770 = vunpack.c.l.b16 %v1702
        %v1771 = vunpack.c.l.b16 %v1703
        %v1772 = vunpack.c.l.b16 %v1704
        %v1773 = vunpack.c.l.b16 %v1705
        %v1774 = vunpack.c.l.b16 %v1706
        %v1775 = vunpack.c.l.b16 %v1707
        %v1776 = vunpack.c.l.b16 %v1708
        %v1777 = vunpack.c.l.b16 %v1709
        %v1778 = vunpack.c.l.b16 %v1710
        %v1779 = vunpack.c.l.b16 %v1711
        %v1780 = vunpack.c.l.b16 %v1712
        %v1781 = vunpack.c.l.b16 %v1713
        %v1782 = vunpack.c.l.b16 %v1714
        %v1783 = vunpack.c.l.b16 %v1715
        %v1784 = vunpack.c.l.b16 %v1716
        %v1785 = vunpack.c.l.b16 %v1717
        %v1786 = vunpack.c.l.b16 %v1718
        %v1787 = vunpack.c.l.b16 %v1719
        %v1788 = vpack.c.b16 %v1755, %v1754
        %v1789 = vpack.c.b16 %v1757, %v1756
        %v1790 = vpack.c.b16 %v1759, %v1758
        %v1791 = vpack.c.b16 %v1761, %v1760
        %v1792 = vpack.c.b16 %v1763, %v1762
        %v1793 = vpack.c.b16 %v1765, %v1764
        %v1794 = vpack.c.b16 %v1767, %v1766
        %v1795 = vpack.c.b16 %v1769, %v1768
        %v1796 = vpack.c.b16 %v1771, %v1770
        %v1797 = vpack.c.b16 %v1773, %v1772
        %v1798 = vpack.c.b16 %v1775, %v1774
        %v1799 = vpack.c.b16 %v1777, %v1776
        %v1800 = vpack.c.b16 %v1779, %v1778
        %v1801 = vpack.c.b16 %v1781, %v1780
        %v1802 = vpack.c.b16 %v1783, %v1782
        %v1803 = vpack.c.b16 %v1785, %v1784
        %v1804 = vpack.c.b16 %v1787, %v1786
        %vm1821 = vcmask 89088
        %v1823 = vsel %vm1821, %v1682, 0
        %v1826 = vsel %vm1821, %v1685, 0
        %vm1828 = vcmask 1044480
        %vm1829 = vcmask 1045504
        %v1830 = vsel %vm1828, 4294967295, 65535
        %v1831 = vsel %vm1829, %v1830, 0
        %v1833 = vand.u32 %v1804, %v1831
        %1835 = vmatpush.bf16.msra.mxu0 %v1795
        %1836 = vmatpush.bf16.msra.mxu0 %v1794
        %1837 = vmatpush.bf16.msra.mxu0 %v1793
        %1838 = vmatpush.bf16.msra.mxu0 %v1792
        %1839 = vmatpush.bf16.msra.mxu0 %v1791
        %1840 = vmatpush.bf16.msra.mxu0 %v1790
        %1841 = vmatpush.bf16.msra.mxu0 %v1789
        %1842 = vmatpush.bf16.msra.mxu0 %v1788
        %1843 = vmatmul.bf16.gmra.mxu0 %v1680
        %v1844 = vpop.f32.mrf.mxu0
        %v1845 = vadd.f32 0.0, %v1844
        %v1846 = vpop.f32.mrf.mxu0
        %v1847 = vadd.f32 0.0, %v1846
        %1848 = vmatmul.bf16.gmra.mxu0 %v1683
        %v1849 = vpop.f32.mrf.mxu0
        %v1850 = vadd.f32 0.0, %v1849
        %v1851 = vpop.f32.mrf.mxu0
        %v1852 = vadd.f32 0.0, %v1851
        %1853 = vdwg.mxu0
        %1854 = vmatpush.bf16.msra.mxu0 %v1803
        %1855 = vmatpush.bf16.msra.mxu0 %v1802
        %1856 = vmatpush.bf16.msra.mxu0 %v1801
        %1857 = vmatpush.bf16.msra.mxu0 %v1800
        %1858 = vmatpush.bf16.msra.mxu0 %v1799
        %1859 = vmatpush.bf16.msra.mxu0 %v1798
        %1860 = vmatpush.bf16.msra.mxu0 %v1797
        %1861 = vmatpush.bf16.msra.mxu0 %v1796
        %1862 = vmatmul.bf16.gmra.mxu0 %v1681
        %v1863 = vpop.f32.mrf.mxu0
        %v1864 = vadd.f32 %v1845, %v1863
        %v1865 = vpop.f32.mrf.mxu0
        %v1866 = vadd.f32 %v1847, %v1865
        %1867 = vmatmul.bf16.gmra.mxu0 %v1684
        %v1868 = vpop.f32.mrf.mxu0
        %v1869 = vadd.f32 %v1850, %v1868
        %v1870 = vpop.f32.mrf.mxu0
        %v1871 = vadd.f32 %v1852, %v1870
        %1872 = vdwg.mxu0
        %1873 = vmatpush.bf16.msra.mxu0 0
        %1874 = vmatpush.bf16.msra.mxu0 0
        %1875 = vmatpush.bf16.msra.mxu0 0
        %1876 = vmatpush.bf16.msra.mxu0 0
        %1877 = vmatpush.bf16.msra.mxu0 0
        %1878 = vmatpush.bf16.msra.mxu0 0
        %1879 = vmatpush.bf16.msra.mxu0 0
        %1880 = vmatpush.bf16.msra.mxu0 %v1833
        %1881 = vmatmul.bf16.gmra.mxu0 %v1823
        %v1882 = vpop.f32.mrf.mxu0
        %v1883 = vadd.f32 %v1864, %v1882
        %v1884 = vpop.f32.mrf.mxu0
        %v1885 = vadd.f32 %v1866, %v1884
        %1886 = vmatmul.bf16.gmra.mxu0 %v1826
        %v1887 = vpop.f32.mrf.mxu0
        %v1888 = vadd.f32 %v1869, %v1887
        %v1889 = vpop.f32.mrf.mxu0
        %v1890 = vadd.f32 %v1871, %v1889
        %1891 = vdwg.mxu0
        %1892 = vst [vmem:[%s305] sm:$0xff] %v1883
        %1893 = vst [vmem:[%s305 + $0x8] sm:$0xff] %v1885
        %1894 = vst [vmem:[%s305 + $0x10] sm:$0xff] %v1888
        %1895 = vst [vmem:[%s305 + $0x18] sm:$0xff] %v1890
        %s1896 = sand.u32 %s183, 1
        %s1897 = scalar_lea.sflag [#allocation4], %s1896
        %s1898 = sand.u32 %s183, 1
        %s1899 = smul.addr %s1898, 32
        %s1900 = scalar_lea.vmem [#allocation7], %s1899
        // Predicated region
        $region57: #{tpu_custom_call.1} parent=47 // pred_check
          %p1901 = pneg %p193
        $region58: #{tpu_custom_call.1} parent=47 // pred_check_branch
          %1903 = sbr.rel (%p1901) target = $region60
        $region59: #{tpu_custom_call.1} parent=47 // pred_region
          %1905 = vsyncadd %s1897, 0
          %s1906 = smul.addr %s23, 4
          %s1907 = smul.addr %s1906, 8
          %s1908 = scalar_lea.hbm %s7, %s1907
          %s1909 = sshll.u32 %s1900, 4
          %s1910 = int_to_ptr.vmem [resolvable:$true] %s1909
          %s1911 = sshll.u32 %s1908, 4
          %s1912 = int_to_ptr.hbm [resolvable:$true] %s1911
          %1917 = dma.vmem_to_hbm [thread:$0]  %s1910, 512, %s1912, %s1897, 128, 128, 8
        $region60: #{tpu_custom_call.1} parent=47 // pred_fallthru
          _
      $region48: #{tpu_custom_call.1} parent=5 // pred_fallthru
        _
      %p1918 = scmp.le.s32.totalorder 2, %s18
      // Predicated region
      $region61: #{tpu_custom_call.1} parent=5 // pred_check
        %p1919 = pneg %p1918
      $region62: #{tpu_custom_call.1} parent=5 // pred_check_branch
        %1921 = sbr.rel (%p1919) target = $region64
      $region63: #{tpu_custom_call.1} parent=5 // pred_region
        %s1922 = ssub.s32 %s18, 2
        // Predicated region
        $region65: #{tpu_custom_call.1} parent=63 // pred_check
          %p1923 = pneg %p199
        $region66: #{tpu_custom_call.1} parent=63 // pred_check_branch
          %1925 = sbr.rel (%p1923) target = $region68
        $region67: #{tpu_custom_call.1} parent=63 // pred_region
          %s1926 = sand.u32 %s184, 1
          %s1927 = scalar_lea.sflag [#allocation4], %s1926
          %s1928 = sand.u32 %s184, 1
          %s1929 = smul.addr %s1928, 32
          %s1930 = scalar_lea.vmem [#allocation7], %s1929
          %1932 = dma.done %s1927, 512
        $region68: #{tpu_custom_call.1} parent=63 // pred_fallthru
          _
      $region64: #{tpu_custom_call.1} parent=5 // pred_fallthru
        _
    $region6: #{tpu_custom_call.1} parent=1 // loop_footer
      %s22 = sadd.s32 1, %s18
    $region7: #{tpu_custom_call.1} parent=1 // loop_footer_branch
      %17 = sbr.rel target = $region3
    $region8: #{tpu_custom_call.1} parent=1 // loop_exit
      _
    %1933 = vsyncpa [#allocation3], 1
    %s1934 = scalar_lea.sflag [#allocation3], 1
    %1935 = vsyncpa %s1934, 1
    %1936 = vsyncpa [#allocation6], 1
    %1937 = vsyncpa [#allocation4], 1
    %s1938 = scalar_lea.sflag [#allocation4], 1
    %1939 = vsyncpa %s1938, 1

</llo_original>
